<compile_context>
chip_gen: v7x
topology: tpu7x:2x2x1
jax: 0.10.0
libtpu: 0.0.40
codegen_flags: <defaults>
</compile_context>

<pallas_src>
import jax
import jax.numpy as jnp
from jax import lax
from jax.experimental import pallas as pl
from jax.experimental.pallas import tpu as pltpu


def _vq_kernel(x_ref, e_ref, et_ref, esq_ref, q_ref, ind_ref, err_ref):
    """One row-tile of the vector quantizer.

    x_ref   : (TM, dim)        inputs (compute dtype)
    e_ref   : (dim, n_embed)   codebook (constant block)
    et_ref  : (n_embed, dim)   transposed codebook (constant block, hoisted)
    esq_ref : (1, n_embed)     ||embed||^2 per code, f32 (hoisted)
    q_ref   : (TM, dim)        quantized vectors (nearest codes)
    ind_ref : (1, TM)   i32    nearest-code indices (lane-dense row block)
    err_ref : (1, TM)   f32    per-row sum((quant - x)^2) (lane-dense row block)
    """
    x = x_ref[...]                                            # (TM, dim)
    e = e_ref[...]                                            # (dim, n_embed)
    et = et_ref[...]                                          # (n_embed, dim)
    e_sq = esq_ref[...]                                       # (1, n_embed) f32
    n_embed = e.shape[-1]

    # argmin over codes of ||x - e||^2; the per-row constant ||x||^2 is dropped
    # (argmin-invariant): score = ||e||^2 - 2 x.e
    xe = jnp.dot(x, e, preferred_element_type=jnp.float32)    # MXU, (TM, n_embed)
    score = e_sq - 2.0 * xe

    min_s = jnp.min(score, axis=-1, keepdims=True)
    iota = lax.broadcasted_iota(jnp.int32, score.shape, 1)    # (TM, n_embed)
    sentinel = jnp.int32(n_embed)
    ind = jnp.min(jnp.where(score == min_s, iota, sentinel), axis=-1)  # (TM,)

    # one-hot gather of code rows:  quant = onehot @ embed.T (embed.T hoisted)
    onehot = (iota == ind[:, None]).astype(et.dtype)          # (TM, n_embed)
    quant = jnp.dot(onehot, et, preferred_element_type=jnp.float32)  # (TM, dim)

    q_ref[...] = quant.astype(q_ref.dtype)
    ind_ref[...] = ind[None, :].astype(jnp.int32)             # lane-dense store

    d = quant - x.astype(jnp.float32)
    err_ref[...] = jnp.sum(d * d, axis=-1)[None, :]           # lane-dense store


def _pick_row_tile(n_rows, dim, n_embed, itemsize, vmem_budget, row_tile):
    """Pick a row tile: multiple of 128, VMEM-budgeted, capped at 2048."""
    if row_tile is not None:
        tm = max(128, (int(row_tile) // 128) * 128)
    else:
        # per-row VMEM bytes: double-buffered x + q blocks, ~3 (TM, n_embed) f32
        # temporaries (xe / score / onehot), f32 quant temp, ind/err row blocks.
        bytes_per_row = (2 * dim * itemsize) * 2 + 3 * n_embed * 4 + dim * 4 + 16
        fixed = 2 * (2 * dim * n_embed * itemsize + n_embed * 4)  # embed, embed.T, e_sq
        tm = max(vmem_budget - fixed, 0) // max(bytes_per_row, 1)
        tm = max(128, min(2048, (tm // 128) * 128))
    # never bigger than the (128-rounded) problem
    tm = min(tm, max(128, ((n_rows + 127) // 128) * 128))
    # prefer >= 2 grid tiles so the "parallel" row grid shards across both
    # TensorCores on v7x (per-tile err partials stay core-safe).
    if tm > 128 and -(-n_rows // tm) < 2:
        tm = max(128, ((tm // 2) // 128) * 128)
    return tm


def quantize_forward(x, embed, *, row_tile=None, compute_dtype=jnp.float32):
    """Pallas implementation of Quantize.forward (forward-value semantics).

    x     : (..., dim) float, channels-last
    embed : (dim, n_embed) float codebook

    Returns (quantize, embed_ind, diff, embed_loss); diff == embed_loss as values
    (the .detach() calls in the PyTorch module only affect gradients).
    """
    dim, n_embed = embed.shape
    lead_shape = x.shape[:-1]
    x_f32 = x.astype(jnp.float32)
    flat = x_f32.reshape(-1, dim).astype(compute_dtype)
    n_rows = flat.shape[0]

    embed_c = embed.astype(compute_dtype)
    embed_t = jnp.asarray(embed_c.T)                               # (n_embed, dim)
    e_sq = jnp.sum(embed.astype(jnp.float32) ** 2, axis=0, keepdims=True)  # (1, n_embed)

    # ---- VMEM budget / tile selection (v7x has 64 MiB physical VMEM) ----
    try:
        vmem_cap = int(pltpu.get_tpu_info().vmem_capacity_bytes)
    except Exception:
        vmem_cap = 64 << 20
    vmem_budget = vmem_cap // 2
    itemsize = jnp.dtype(compute_dtype).itemsize
    tm = _pick_row_tile(n_rows, dim, n_embed, itemsize, vmem_budget, row_tile)

    num_tiles = pl.cdiv(n_rows, tm)
    padded_rows = num_tiles * tm
    if padded_rows != n_rows:
        flat = jnp.pad(flat, ((0, padded_rows - n_rows), (0, 0)))

    vmem_limit = int(min(vmem_cap * 3 // 4, 96 * 1024 * 1024))

    q, ind2d, err2d = pl.pallas_call(
        _vq_kernel,
        out_shape=(
            jax.ShapeDtypeStruct((padded_rows, dim), compute_dtype),
            jax.ShapeDtypeStruct((1, padded_rows), jnp.int32),
            jax.ShapeDtypeStruct((1, padded_rows), jnp.float32),
        ),
        grid_spec=pltpu.PrefetchScalarGridSpec(
            num_scalar_prefetch=0,
            grid=(num_tiles,),
            in_specs=[
                pl.BlockSpec((tm, dim), lambda i: (i, 0)),          # x rows
                pl.BlockSpec((dim, n_embed), lambda i: (0, 0)),     # embed (const)
                pl.BlockSpec((n_embed, dim), lambda i: (0, 0)),     # embed.T (const)
                pl.BlockSpec((1, n_embed), lambda i: (0, 0)),       # ||embed||^2 (const)
            ],
            out_specs=[
                pl.BlockSpec((tm, dim), lambda i: (i, 0)),          # quantized rows
                pl.BlockSpec((1, tm), lambda i: (0, i)),            # indices (lane-dense)
                pl.BlockSpec((1, tm), lambda i: (0, i)),            # per-row err (lane-dense)
            ],
        ),
        compiler_params=pltpu.CompilerParams(
            dimension_semantics=("parallel",),
            vmem_limit_bytes=vmem_limit,
        ),
    )(flat, embed_c, embed_t, e_sq)

    quantize = q[:n_rows].astype(jnp.float32).reshape(x.shape)
    embed_ind = ind2d[0, :n_rows].reshape(lead_shape)

    # mean over all elements of (quantize - input)^2 (padded rows sliced off)
    diff = jnp.sum(err2d[0, :n_rows]) / jnp.float32(n_rows * dim)
    embed_loss = diff  # identical forward value; detach only changes grads

    # straight-through estimator: value is exactly `quantize`
    quantize = x_f32 + lax.stop_gradient(quantize - x_f32)
    return quantize, embed_ind, diff, embed_loss


def _reference_forward(x, embed):
    """Pure-JAX reference mirroring the PyTorch forward."""
    dim, n_embed = embed.shape
    flat = x.reshape(-1, dim)
    dist = (jnp.sum(flat**2, axis=1, keepdims=True)
            - 2.0 * flat @ embed
            + jnp.sum(embed**2, axis=0, keepdims=True))
    ind = jnp.argmin(dist, axis=1)
    quant = embed.T[ind].reshape(x.shape)
    diff = jnp.mean((quant - x) ** 2)
    return quant, ind.reshape(x.shape[:-1]), diff, diff


if __name__ == "__main__":
    # Module hyperparameters (small, consistent with the module __init__)
    dim = 32
    n_embed = 64

    key = jax.random.PRNGKey(0)
    k_embed, k_x = jax.random.split(key)

    # embed = 2 * rand(dim, n_embed) - 1   (deterministic init, no checkpoint)
    embed = 2.0 * jax.random.uniform(k_embed, (dim, n_embed),
                                     dtype=jnp.float32) - 1.0

    # channels-last (B, H, W, dim) input; 192 rows -> exercises multi-tile grid
    # and the row-padding path (192 is not a multiple of the 128-row tile).
    x = jax.random.normal(k_x, (3, 8, 8, dim), dtype=jnp.float32)

    quant, embed_ind, diff, embed_loss = quantize_forward(x, embed)
    jax.block_until_ready((quant, embed_ind, diff, embed_loss))

    # correctness check against pure-JAX reference
    rq, rind, rdiff, _ = _reference_forward(x, embed)
    assert quant.shape == x.shape and quant.dtype == jnp.float32
    assert embed_ind.shape == x.shape[:-1]
    assert jnp.all(embed_ind == rind), "index mismatch"
    assert jnp.allclose(quant, rq, atol=1e-5, rtol=1e-5), "quantize mismatch"
    assert jnp.allclose(diff, rdiff, atol=1e-6, rtol=1e-5), "loss mismatch"
    assert jnp.allclose(embed_loss, diff), "embed_loss mismatch"

    print("KERNEL_OK")
</pallas_src>

<mosaic_0001>
module attributes {stable_mosaic.version = 11 : i64} {
  func.func @_vq_kernel(%arg0: i32, %arg1: memref<128x32xf32, #tpu.memory_space<vmem>>, %arg2: memref<32x64xf32, #tpu.memory_space<vmem>>, %arg3: memref<64x32xf32, #tpu.memory_space<vmem>>, %arg4: memref<1x64xf32, #tpu.memory_space<vmem>>, %arg5: memref<128x32xf32, #tpu.memory_space<vmem>>, %arg6: memref<1x128xi32, #tpu.memory_space<vmem>>, %arg7: memref<1x128xf32, #tpu.memory_space<vmem>>) attributes {dimension_semantics = [#tpu.dimension_semantics<parallel>], iteration_bounds = array<i64: 2>, scalar_prefetch = 0 : i64, scratch_operands = 0 : i64, tpu.core_type = #tpu.core_type<tc>, window_params = [{transform_indices = @transform_0, window_bounds = array<i64: 128, 32>}, {pipeline_mode = #tpu.pipeline_mode<synchronous>, transform_indices = @transform_1, window_bounds = array<i64: 32, 64>}, {pipeline_mode = #tpu.pipeline_mode<synchronous>, transform_indices = @transform_2, window_bounds = array<i64: 64, 32>}, {pipeline_mode = #tpu.pipeline_mode<synchronous>, transform_indices = @transform_3, window_bounds = array<i64: 1, 64>}, {transform_indices = @transform_4, window_bounds = array<i64: 128, 32>}, {transform_indices = @transform_5, window_bounds = array<i64: 1, 128>}, {transform_indices = @transform_6, window_bounds = array<i64: 1, 128>}]} {
    %c0 = arith.constant 0 : index
    %c0_0 = arith.constant 0 : index
    %0 = vector.load %arg1[%c0, %c0_0] : memref<128x32xf32, #tpu.memory_space<vmem>>, vector<128x32xf32>
    %c0_1 = arith.constant 0 : index
    %c0_2 = arith.constant 0 : index
    %1 = vector.load %arg2[%c0_1, %c0_2] : memref<32x64xf32, #tpu.memory_space<vmem>>, vector<32x64xf32>
    %c0_3 = arith.constant 0 : index
    %c0_4 = arith.constant 0 : index
    %2 = vector.load %arg3[%c0_3, %c0_4] : memref<64x32xf32, #tpu.memory_space<vmem>>, vector<64x32xf32>
    %c0_5 = arith.constant 0 : index
    %c0_6 = arith.constant 0 : index
    %3 = vector.load %arg4[%c0_5, %c0_6] : memref<1x64xf32, #tpu.memory_space<vmem>>, vector<1x64xf32>
    %cst = arith.constant dense<0.000000e+00> : vector<128x64xf32>
    %4 = tpu.matmul %0, %1, %cst {dimension_numbers = #tpu.dot_dimension_numbers<[1], [0], [0], [1], [0, 0, 1, 1], [], []>} : vector<128x32xf32>, vector<32x64xf32>, vector<128x64xf32> -> vector<128x64xf32>
    %cst_7 = arith.constant 2.000000e+00 : f32
    %5 = vector.broadcast %cst_7 : f32 to vector<128x64xf32>
    %6 = arith.mulf %5, %4 : vector<128x64xf32>
    %7 = vector.broadcast %3 : vector<1x64xf32> to vector<128x64xf32>
    %8 = arith.subf %7, %6 : vector<128x64xf32>
    %cst_8 = arith.constant dense<0x7F800000> : vector<128xf32>
    %9 = vector.multi_reduction <minimumf>, %8, %cst_8 [1] : vector<128x64xf32> to vector<128xf32>
    %10 = vector.shape_cast %9 : vector<128xf32> to vector<128x1xf32>
    %11 = tpu.iota {dimensions = array<i32: 1>} : vector<128x64xi32>
    %12 = vector.broadcast %10 : vector<128x1xf32> to vector<128x64xf32>
    %13 = arith.cmpf oeq, %8, %12 : vector<128x64xf32>
    %c64_i32 = arith.constant 64 : i32
    %14 = vector.broadcast %c64_i32 : i32 to vector<128x64xi32>
    %15 = arith.select %13, %11, %14 : vector<128x64xi1>, vector<128x64xi32>
    %cst_9 = arith.constant dense<2147483647> : vector<128xi32>
    %16 = vector.multi_reduction <minsi>, %15, %cst_9 [1] : vector<128x64xi32> to vector<128xi32>
    %17 = vector.shape_cast %16 : vector<128xi32> to vector<128x1xi32>
    %18 = vector.broadcast %17 : vector<128x1xi32> to vector<128x64xi32>
    %19 = arith.cmpi eq, %11, %18 : vector<128x64xi32>
    %20 = arith.extui %19 : vector<128x64xi1> to vector<128x64xi32>
    %21 = arith.sitofp %20 : vector<128x64xi32> to vector<128x64xf32>
    %cst_10 = arith.constant dense<0.000000e+00> : vector<128x32xf32>
    %22 = tpu.matmul %21, %2, %cst_10 {dimension_numbers = #tpu.dot_dimension_numbers<[1], [0], [0], [1], [0, 0, 1, 1], [], []>} : vector<128x64xf32>, vector<64x32xf32>, vector<128x32xf32> -> vector<128x32xf32>
    %c0_11 = arith.constant 0 : index
    %c0_12 = arith.constant 0 : index
    %23 = vector.load %arg5[%c0_11, %c0_12] : memref<128x32xf32, #tpu.memory_space<vmem>>, vector<128x32xf32>
    tpu.vector_store %arg5[%c0_11, %c0_12], %22 {strides = array<i32>} : memref<128x32xf32, #tpu.memory_space<vmem>>, vector<128x32xf32>,
    %24 = vector.shape_cast %16 : vector<128xi32> to vector<1x128xi32>
    %c0_13 = arith.constant 0 : index
    %c0_14 = arith.constant 0 : index
    %25 = vector.load %arg6[%c0_13, %c0_14] : memref<1x128xi32, #tpu.memory_space<vmem>>, vector<1x128xi32>
    tpu.vector_store %arg6[%c0_13, %c0_14], %24 {strides = array<i32>} : memref<1x128xi32, #tpu.memory_space<vmem>>, vector<1x128xi32>,
    %26 = arith.subf %22, %0 : vector<128x32xf32>
    %27 = arith.mulf %26, %26 : vector<128x32xf32>
    %cst_15 = arith.constant dense<0.000000e+00> : vector<128xf32>
    %28 = vector.multi_reduction <add>, %27, %cst_15 [1] : vector<128x32xf32> to vector<128xf32>
    %29 = vector.shape_cast %28 : vector<128xf32> to vector<1x128xf32>
    %c0_16 = arith.constant 0 : index
    %c0_17 = arith.constant 0 : index
    %30 = vector.load %arg7[%c0_16, %c0_17] : memref<1x128xf32, #tpu.memory_space<vmem>>, vector<1x128xf32>
    tpu.vector_store %arg7[%c0_16, %c0_17], %29 {strides = array<i32>} : memref<1x128xf32, #tpu.memory_space<vmem>>, vector<1x128xf32>,
    return
  }
  func.func @transform_0(%arg0: i32) -> (i32, i32) {
    %c0_i32 = arith.constant 0 : i32
    %c0_i32_0 = arith.constant 0 : i32
    return %arg0, %c0_i32 : i32, i32
  }
  func.func @transform_1(%arg0: i32) -> (i32, i32) {
    %c0_i32 = arith.constant 0 : i32
    %c0_i32_0 = arith.constant 0 : i32
    %c0_i32_1 = arith.constant 0 : i32
    return %c0_i32, %c0_i32_0 : i32, i32
  }
  func.func @transform_2(%arg0: i32) -> (i32, i32) {
    %c0_i32 = arith.constant 0 : i32
    %c0_i32_0 = arith.constant 0 : i32
    %c0_i32_1 = arith.constant 0 : i32
    return %c0_i32, %c0_i32_0 : i32, i32
  }
  func.func @transform_3(%arg0: i32) -> (i32, i32) {
    %c0_i32 = arith.constant 0 : i32
    %c0_i32_0 = arith.constant 0 : i32
    %c0_i32_1 = arith.constant 0 : i32
    return %c0_i32, %c0_i32_0 : i32, i32
  }
  func.func @transform_4(%arg0: i32) -> (i32, i32) {
    %c0_i32 = arith.constant 0 : i32
    %c0_i32_0 = arith.constant 0 : i32
    return %arg0, %c0_i32 : i32, i32
  }
  func.func @transform_5(%arg0: i32) -> (i32, i32) {
    %c0_i32 = arith.constant 0 : i32
    %c0_i32_0 = arith.constant 0 : i32
    return %c0_i32, %arg0 : i32, i32
  }
  func.func @transform_6(%arg0: i32) -> (i32, i32) {
    %c0_i32 = arith.constant 0 : i32
    %c0_i32_0 = arith.constant 0 : i32
    return %c0_i32, %arg0 : i32, i32
  }
}

</mosaic_0001>

<llo_original>
// kernel: tpu_custom_call.1
$region0: #{tpu_custom_call.1}
  #allocation0 [shape = 'u32[]', space=smem, size = 0x4, offset = 0x4, fixed_abs, tag = 'smem constant byte address 0x4 - core index']
  #allocation1 [shape = 'u32[144,128]{1,0:T(1,128)}', space=vmem, size = 0x12000, scoped, tag = 'internal scratch']
  %s0 = inlined_call_operand.vmem [shape: f32[256,32], index: 0, kind: input, shape index: {}]
  %s1 = inlined_call_operand.vmem [shape: f32[32,64], index: 1, kind: input, shape index: {}]
  %s2 = inlined_call_operand.vmem [shape: f32[64,32], index: 2, kind: input, shape index: {}]
  %s3 = inlined_call_operand.vmem [shape: f32[1,64], index: 3, kind: input, shape index: {}]
  %s4 = inlined_call_operand.vmem [shape: f32[256,32], index: 4, kind: output, shape index: {0}]
  %s5 = inlined_call_operand.hbm [shape: s32[1,256], index: 5, kind: output, shape index: {1}]
  %s6 = inlined_call_operand.hbm [shape: f32[1,256], index: 6, kind: output, shape index: {2}]
  %7 = xla_tuple %s4, %s5, %s6
  %s8 = sld [smem:[#allocation0]]
  $region65: #{tpu_custom_call.1} parent=0
    _
  %s10 = ssub.s32 1, %s8
  %s11 = scalar_select 0, %s10, %s8
  $region1: #{tpu_custom_call.1} parent=0
    #allocation2 [shape = 'u8[1024]{0}', space=vmem, size = 0x400, scoped, tag = 'output window, operand 1']
    #allocation3 [shape = 's32[2]{0}', space=sflag, size = 0x8, scoped, tag = 'scoped memory for tpu_custom_call.1']
    #allocation4 [shape = 'u8[1024]{0}', space=vmem, size = 0x400, scoped, tag = 'output window, operand 2']
    #allocation5 [shape = 's32[2]{0}', space=sflag, size = 0x8, scoped, tag = 'scoped memory for tpu_custom_call.1']
    %12 = vsyncpa [#allocation3], 0
    %s13 = scalar_lea.sflag [#allocation3], 1
    %14 = vsyncpa %s13, 0
    %15 = vsyncpa [#allocation5], 0
    %s16 = scalar_lea.sflag [#allocation5], 1
    %17 = vsyncpa %s16, 0
    loop: start=0, step=1, limit=4
    $region2: #{tpu_custom_call.1} parent=1 // loop_pre_header
      _
    $region3: #{tpu_custom_call.1} parent=1 // loop_header
      %s19 = sphi 0, %s23
      %p20 = scmp.ge.s32.totalorder %s19, 4
      %s29 = sphi 0, %s31
      %s32 = sphi 0, %s29
      %s33 = sphi 0, %s32
      %s49 = sphi 0, %s33
      %s53 = sphi 0, %s53
      %s55 = sphi 0, %s53
      %s56 = sphi 0, %s55
      %s70 = sphi 0, %s56
      %s74 = sphi 0, %s74
      %s76 = sphi 0, %s74
      %s77 = sphi 0, %s76
      %s91 = sphi 0, %s77
      %s95 = sphi 0, %s95
      %s97 = sphi 0, %s95
      %s98 = sphi 0, %s97
      %s112 = sphi 0, %s98
      %s118 = sphi 0, %s120
      %s121 = sphi 0, %s118
      %s122 = sphi 0, %s121
      %s138 = sphi 0, %s122
      %s144 = sphi 0, %s146
      %s147 = sphi 0, %s144
      %s148 = sphi 0, %s147
      %s164 = sphi 0, %s148
      %s170 = sphi 0, %s172
      %s173 = sphi 0, %s170
      %s174 = sphi 0, %s173
      %s190 = sphi 0, %s174
    $region4: #{tpu_custom_call.1} parent=1 // loop_header_branch
      %22 = sbr.rel (%p20) target = $region8
    $region5: #{tpu_custom_call.1} parent=1 // loop_body
      %s24 = ssub.s32 %s19, 1
      %s25 = ssub.s32 %s19, 2
      %s26 = sadd.s32 %s19, 1
      %s27 = ssub.s32 %s19, %s26
      %p28 = scmp.eq.s32.totalorder %s27, 0
      %s30 = sadd.s32 %s29, 1
      %s31 = scalar_select %p28, %s29, %s30
      %p34 = pneg %p28
      %p35 = scmp.eq.s32.totalorder %s19, 1
      %p36 = por %p34, %p35
      %p37 = scmp.ne.s32.totalorder %s29, %s32
      %p38 = scmp.eq.s32.totalorder %s19, 0
      %p39 = por %p37, %p38
      %p40 = scmp.ne.s32.totalorder %s29, %s32
      %p41 = scmp.eq.s32.totalorder %s24, 1
      %p42 = por %p40, %p41
      %p43 = scmp.ne.s32.totalorder %s32, %s33
      %p44 = scmp.eq.s32.totalorder %s24, 0
      %p45 = por %p43, %p44
      %p46 = scmp.ne.s32.totalorder %s32, %s33
      %p47 = scmp.eq.s32.totalorder %s25, 1
      %p48 = por %p46, %p47
      %p50 = scmp.ne.s32.totalorder %s33, %s49
      %p51 = scmp.eq.s32.totalorder %s25, 0
      %p52 = por %p50, %p51
      %s54 = sadd.s32 %s53, 1
      %p57 = scmp.eq.s32.totalorder %s19, 1
      %p58 = scmp.ne.s32.totalorder %s53, %s55
      %p59 = scmp.eq.s32.totalorder %s19, 0
      %p60 = por %p58, %p59
      %p61 = scmp.ne.s32.totalorder %s53, %s55
      %p62 = scmp.eq.s32.totalorder %s24, 1
      %p63 = por %p61, %p62
      %p64 = scmp.ne.s32.totalorder %s55, %s56
      %p65 = scmp.eq.s32.totalorder %s24, 0
      %p66 = por %p64, %p65
      %p67 = scmp.ne.s32.totalorder %s55, %s56
      %p68 = scmp.eq.s32.totalorder %s25, 1
      %p69 = por %p67, %p68
      %p71 = scmp.ne.s32.totalorder %s56, %s70
      %p72 = scmp.eq.s32.totalorder %s25, 0
      %p73 = por %p71, %p72
      %s75 = sadd.s32 %s74, 1
      %p78 = scmp.eq.s32.totalorder %s19, 1
      %p79 = scmp.ne.s32.totalorder %s74, %s76
      %p80 = scmp.eq.s32.totalorder %s19, 0
      %p81 = por %p79, %p80
      %p82 = scmp.ne.s32.totalorder %s74, %s76
      %p83 = scmp.eq.s32.totalorder %s24, 1
      %p84 = por %p82, %p83
      %p85 = scmp.ne.s32.totalorder %s76, %s77
      %p86 = scmp.eq.s32.totalorder %s24, 0
      %p87 = por %p85, %p86
      %p88 = scmp.ne.s32.totalorder %s76, %s77
      %p89 = scmp.eq.s32.totalorder %s25, 1
      %p90 = por %p88, %p89
      %p92 = scmp.ne.s32.totalorder %s77, %s91
      %p93 = scmp.eq.s32.totalorder %s25, 0
      %p94 = por %p92, %p93
      %s96 = sadd.s32 %s95, 1
      %p99 = scmp.eq.s32.totalorder %s19, 1
      %p100 = scmp.ne.s32.totalorder %s95, %s97
      %p101 = scmp.eq.s32.totalorder %s19, 0
      %p102 = por %p100, %p101
      %p103 = scmp.ne.s32.totalorder %s95, %s97
      %p104 = scmp.eq.s32.totalorder %s24, 1
      %p105 = por %p103, %p104
      %p106 = scmp.ne.s32.totalorder %s97, %s98
      %p107 = scmp.eq.s32.totalorder %s24, 0
      %p108 = por %p106, %p107
      %p109 = scmp.ne.s32.totalorder %s97, %s98
      %p110 = scmp.eq.s32.totalorder %s25, 1
      %p111 = por %p109, %p110
      %p113 = scmp.ne.s32.totalorder %s98, %s112
      %p114 = scmp.eq.s32.totalorder %s25, 0
      %p115 = por %p113, %p114
      %s116 = ssub.s32 %s19, %s26
      %p117 = scmp.eq.s32.totalorder %s116, 0
      %s119 = sadd.s32 %s118, 1
      %s120 = scalar_select %p117, %s118, %s119
      %p123 = pneg %p117
      %p124 = scmp.eq.s32.totalorder %s19, 1
      %p125 = por %p123, %p124
      %p126 = scmp.ne.s32.totalorder %s118, %s121
      %p127 = scmp.eq.s32.totalorder %s19, 0
      %p128 = por %p126, %p127
      %p129 = scmp.ne.s32.totalorder %s118, %s121
      %p130 = scmp.eq.s32.totalorder %s24, 1
      %p131 = por %p129, %p130
      %p132 = scmp.ne.s32.totalorder %s121, %s122
      %p133 = scmp.eq.s32.totalorder %s24, 0
      %p134 = por %p132, %p133
      %p135 = scmp.ne.s32.totalorder %s121, %s122
      %p136 = scmp.eq.s32.totalorder %s25, 1
      %p137 = por %p135, %p136
      %p139 = scmp.ne.s32.totalorder %s122, %s138
      %p140 = scmp.eq.s32.totalorder %s25, 0
      %p141 = por %p139, %p140
      %s142 = ssub.s32 %s19, %s26
      %p143 = scmp.eq.s32.totalorder %s142, 0
      %s145 = sadd.s32 %s144, 1
      %s146 = scalar_select %p143, %s144, %s145
      %p149 = pneg %p143
      %p150 = scmp.eq.s32.totalorder %s19, 1
      %p151 = por %p149, %p150
      %p152 = scmp.ne.s32.totalorder %s144, %s147
      %p153 = scmp.eq.s32.totalorder %s19, 0
      %p154 = por %p152, %p153
      %p155 = scmp.ne.s32.totalorder %s144, %s147
      %p156 = scmp.eq.s32.totalorder %s24, 1
      %p157 = por %p155, %p156
      %p158 = scmp.ne.s32.totalorder %s147, %s148
      %p159 = scmp.eq.s32.totalorder %s24, 0
      %p160 = por %p158, %p159
      %p161 = scmp.ne.s32.totalorder %s147, %s148
      %p162 = scmp.eq.s32.totalorder %s25, 1
      %p163 = por %p161, %p162
      %p165 = scmp.ne.s32.totalorder %s148, %s164
      %p166 = scmp.eq.s32.totalorder %s25, 0
      %p167 = por %p165, %p166
      %s168 = ssub.s32 %s19, %s26
      %p169 = scmp.eq.s32.totalorder %s168, 0
      %s171 = sadd.s32 %s170, 1
      %s172 = scalar_select %p169, %s170, %s171
      %p175 = pneg %p169
      %p176 = scmp.eq.s32.totalorder %s19, 1
      %p177 = por %p175, %p176
      %p178 = scmp.ne.s32.totalorder %s170, %s173
      %p179 = scmp.eq.s32.totalorder %s19, 0
      %p180 = por %p178, %p179
      %p181 = scmp.ne.s32.totalorder %s170, %s173
      %p182 = scmp.eq.s32.totalorder %s24, 1
      %p183 = por %p181, %p182
      %p184 = scmp.ne.s32.totalorder %s173, %s174
      %p185 = scmp.eq.s32.totalorder %s24, 0
      %p186 = por %p184, %p185
      %p187 = scmp.ne.s32.totalorder %s173, %s174
      %p188 = scmp.eq.s32.totalorder %s25, 1
      %p189 = por %p187, %p188
      %p191 = scmp.ne.s32.totalorder %s174, %s190
      %p192 = scmp.eq.s32.totalorder %s25, 0
      %p193 = por %p191, %p192
      %p194 = scmp.le.s32.totalorder 1, %s19
      %p195 = scmp.lt.s32.totalorder %s19, 3
      %p196 = pnand %p194, %p195
      %p197 = pneg %p196
      // Predicated region
      $region9: #{tpu_custom_call.1} parent=5 // pred_check
        _
      $region10: #{tpu_custom_call.1} parent=5 // pred_check_branch
        %199 = sbr.rel (%p196) target = $region12
      $region11: #{tpu_custom_call.1} parent=5 // pred_region
        %s200 = ssub.s32 %s19, 1
        // Predicated region
        $region13: #{tpu_custom_call.1} parent=11 // pred_check
          %p201 = pneg %p66
        $region14: #{tpu_custom_call.1} parent=11 // pred_check_branch
          %203 = sbr.rel (%p201) target = $region16
        $region15: #{tpu_custom_call.1} parent=11 // pred_region
          _
        $region16: #{tpu_custom_call.1} parent=11 // pred_fallthru
          _
        // Predicated region
        $region17: #{tpu_custom_call.1} parent=11 // pred_check
          %p204 = pneg %p87
        $region18: #{tpu_custom_call.1} parent=11 // pred_check_branch
          %206 = sbr.rel (%p204) target = $region20
        $region19: #{tpu_custom_call.1} parent=11 // pred_region
          _
        $region20: #{tpu_custom_call.1} parent=11 // pred_fallthru
          _
        // Predicated region
        $region21: #{tpu_custom_call.1} parent=11 // pred_check
          %p207 = pneg %p108
        $region22: #{tpu_custom_call.1} parent=11 // pred_check_branch
          %209 = sbr.rel (%p207) target = $region24
        $region23: #{tpu_custom_call.1} parent=11 // pred_region
          _
        $region24: #{tpu_custom_call.1} parent=11 // pred_fallthru
          _
      $region12: #{tpu_custom_call.1} parent=5 // pred_fallthru
        _
      %p210 = scmp.lt.s32.totalorder %s19, 2
      // Predicated region
      $region25: #{tpu_custom_call.1} parent=5 // pred_check
        %p211 = pneg %p210
      $region26: #{tpu_custom_call.1} parent=5 // pred_check_branch
        %213 = sbr.rel (%p211) target = $region28
      $region27: #{tpu_custom_call.1} parent=5 // pred_region
        // Predicated region
        $region29: #{tpu_custom_call.1} parent=27 // pred_check
          %p214 = pneg %p39
        $region30: #{tpu_custom_call.1} parent=27 // pred_check_branch
          %216 = sbr.rel (%p214) target = $region32
        $region31: #{tpu_custom_call.1} parent=27 // pred_region
          %s217 = smul.u32 16, %s19
          %p218 = scmp.lt.s32.totalorder %s217, 31
          %s219 = scalar_select %p218, %s217, 31
          %s220 = smul.addr %s219, 8
          %s221 = scalar_lea.vmem %s0, %s220
          %s222 = smul.u32 16, %s19
        $region32: #{tpu_custom_call.1} parent=27 // pred_fallthru
          _
      $region28: #{tpu_custom_call.1} parent=5 // pred_fallthru
        _
      %p223 = scmp.le.s32.totalorder 1, %s19
      %p224 = scmp.lt.s32.totalorder %s19, 3
      %p225 = pnand %p223, %p224
      %p226 = pneg %p225
      // Predicated region
      $region33: #{tpu_custom_call.1} parent=5 // pred_check
        _
      $region34: #{tpu_custom_call.1} parent=5 // pred_check_branch
        %228 = sbr.rel (%p225) target = $region36
      $region35: #{tpu_custom_call.1} parent=5 // pred_region
        %s229 = ssub.s32 %s19, 1
        %s230 = smul.u32 16, %s24
        %p231 = scmp.lt.s32.totalorder %s230, 31
        %s232 = scalar_select %p231, %s230, 31
        %s233 = smul.addr %s232, 8
        %s234 = scalar_lea.vmem %s0, %s233
        %p235 = pneg %p45
        %p236 = pneg %p42
        %p237 = pneg %p66
        %p238 = pneg %p63
        %p239 = pneg %p87
        %p240 = pneg %p84
        %p241 = pneg %p108
        %p242 = pneg %p105
        %p243 = pneg %p134
        %p244 = pneg %p131
        %s245 = smul.u32 16, %s24
        %p246 = scmp.lt.s32.totalorder %s245, 31
        %s247 = scalar_select %p246, %s245, 31
        %s248 = smul.addr %s247, 8
        %s249 = scalar_lea.vmem %s4, %s248
        %p250 = pneg %p160
        %p251 = pneg %p157
        %s252 = sand.u32 %s147, 1
        %s253 = scalar_lea.sflag [#allocation3], %s252
        %s254 = sand.u32 %s147, 1
        %s255 = scalar_lea.vmem [#allocation2], %s254
        %p256 = pneg %p186
        %p257 = pneg %p183
        %s258 = sand.u32 %s173, 1
        %s259 = scalar_lea.sflag [#allocation5], %s258
        %s260 = sand.u32 %s173, 1
        %s261 = scalar_lea.vmem [#allocation4], %s260
        %s262 = smul.u32 16, %s24
        %p263 = scmp.lt.s32.totalorder %s262, 31
        %s264 = scalar_select %p263, %s262, 31
        %s265 = smul.addr %s264, 8
        %s266 = scalar_lea.vmem %s0, %s265
        %s267 = smul.u32 16, %s24
        %s268 = smul.u32 16, %s24
        %p269 = scmp.lt.s32.totalorder %s268, 31
        %s270 = scalar_select %p269, %s268, 31
        %s271 = smul.addr %s270, 8
        %s272 = scalar_lea.vmem %s4, %s271
        %s273 = smul.u32 16, %s24
        %v274 = vld [vmem:[%s266] sm:$0xff]
        %v275 = vld [vmem:[%s266 + $0x8] sm:$0xff]
        %v276 = vld [vmem:[%s266 + $0x10] sm:$0xff]
        %v277 = vld [vmem:[%s266 + $0x18] sm:$0xff]
        %v278 = vld [vmem:[%s266 + $0x20] sm:$0xff]
        %v279 = vld [vmem:[%s266 + $0x28] sm:$0xff]
        %v280 = vld [vmem:[%s266 + $0x30] sm:$0xff]
        %v281 = vld [vmem:[%s266 + $0x38] sm:$0xff]
        %v282 = vld [vmem:[%s266 + $0x40] sm:$0xff]
        %v283 = vld [vmem:[%s266 + $0x48] sm:$0xff]
        %v284 = vld [vmem:[%s266 + $0x50] sm:$0xff]
        %v285 = vld [vmem:[%s266 + $0x58] sm:$0xff]
        %v286 = vld [vmem:[%s266 + $0x60] sm:$0xff]
        %v287 = vld [vmem:[%s266 + $0x68] sm:$0xff]
        %v288 = vld [vmem:[%s266 + $0x70] sm:$0xff]
        %v289 = vld [vmem:[%s266 + $0x78] sm:$0xff]
        %v290 = vld [vmem:[%s1] sm:$0xff]
        %v291 = vld [vmem:[%s1 + $0x8] sm:$0xff]
        %v292 = vld [vmem:[%s1 + $0x10] sm:$0xff]
        %v293 = vld [vmem:[%s1 + $0x18] sm:$0xff]
        %v294 = vld [vmem:[%s2] sm:$0xff]
        %v295 = vld [vmem:[%s2 + $0x8] sm:$0xff]
        %v296 = vld [vmem:[%s2 + $0x10] sm:$0xff]
        %v297 = vld [vmem:[%s2 + $0x18] sm:$0xff]
        %v298 = vld [vmem:[%s2 + $0x20] sm:$0xff]
        %v299 = vld [vmem:[%s2 + $0x28] sm:$0xff]
        %v300 = vld [vmem:[%s2 + $0x30] sm:$0xff]
        %v301 = vld [vmem:[%s2 + $0x38] sm:$0xff]
        %v302 = vld [vmem:[%s3] sm:$0x1]
        %vm303 = vcmask 261120
        %v305 = vsel %vm303, %v274, 0
        %v308 = vsel %vm303, %v275, 0
        %v311 = vsel %vm303, %v276, 0
        %v314 = vsel %vm303, %v277, 0
        %v317 = vsel %vm303, %v278, 0
        %v320 = vsel %vm303, %v279, 0
        %v323 = vsel %vm303, %v280, 0
        %v326 = vsel %vm303, %v281, 0
        %v329 = vsel %vm303, %v282, 0
        %v332 = vsel %vm303, %v283, 0
        %v335 = vsel %vm303, %v284, 0
        %v338 = vsel %vm303, %v285, 0
        %v341 = vsel %vm303, %v286, 0
        %v344 = vsel %vm303, %v287, 0
        %v347 = vsel %vm303, %v288, 0
        %v350 = vsel %vm303, %v289, 0
        %352 = vmatprep.subr.mxu0 0.0
        %353 = vmatpush1.msra.mxu0 %v290
        %354 = vmatprep.subr.mxu0 0.0
        %355 = vmatpush1.msra.mxu0 %v291
        %356 = vmatprep.subr.mxu0 0.0
        %357 = vmatpush1.msra.mxu0 %v292
        %358 = vmatprep.subr.mxu0 0.0
        %359 = vmatpush1.msra.mxu0 %v293
        %360 = vmatprep.subr.mxu0 0.0
        %361 = vmatpush1.msra.mxu0 0.0
        %362 = vmatprep.subr.mxu0 0.0
        %363 = vmatpush1.msra.mxu0 0.0
        %364 = vmatprep.subr.mxu0 0.0
        %365 = vmatpush1.msra.mxu0 0.0
        %366 = vmatprep.subr.mxu0 0.0
        %367 = vmatpush1.msra.mxu0 0.0
        %368 = vmatprep.subr.mxu0 0.0
        %369 = vmatpush1.msra.mxu0 0.0
        %370 = vmatprep.subr.mxu0 0.0
        %371 = vmatpush1.msra.mxu0 0.0
        %372 = vmatprep.subr.mxu0 0.0
        %373 = vmatpush1.msra.mxu0 0.0
        %374 = vmatprep.subr.mxu0 0.0
        %375 = vmatpush1.msra.mxu0 0.0
        %376 = vmatprep.subr.mxu0 0.0
        %377 = vmatpush1.msra.mxu0 0.0
        %378 = vmatprep.subr.mxu0 0.0
        %379 = vmatpush1.msra.mxu0 0.0
        %380 = vmatprep.subr.mxu0 0.0
        %381 = vmatpush1.msra.mxu0 0.0
        %382 = vmatprep.subr.mxu0 0.0
        %383 = vmatpush1.msra.mxu0 0.0
        %384 = vmatprep.subr.mxu0 0.0
        %385 = vmatpush1.msra.mxu0 0.0
        %386 = vmatprep.subr.mxu0 0.0
        %387 = vmatpush1.msra.mxu0 0.0
        %388 = vmatprep.subr.mxu0 0.0
        %389 = vmatpush1.msra.mxu0 0.0
        %390 = vmatprep.subr.mxu0 0.0
        %391 = vmatpush1.msra.mxu0 0.0
        %392 = vmatprep.subr.mxu0 0.0
        %393 = vmatpush1.msra.mxu0 0.0
        %394 = vmatprep.subr.mxu0 0.0
        %395 = vmatpush1.msra.mxu0 0.0
        %396 = vmatprep.subr.mxu0 0.0
        %397 = vmatpush1.msra.mxu0 0.0
        %398 = vmatprep.subr.mxu0 0.0
        %399 = vmatpush1.msra.mxu0 0.0
        %400 = vmatprep.subr.mxu0 0.0
        %401 = vmatpush1.msra.mxu0 0.0
        %402 = vmatprep.subr.mxu0 0.0
        %403 = vmatpush1.msra.mxu0 0.0
        %404 = vmatprep.subr.mxu0 0.0
        %405 = vmatpush1.msra.mxu0 0.0
        %406 = vmatprep.subr.mxu0 0.0
        %407 = vmatpush1.msra.mxu0 0.0
        %408 = vmatprep.subr.mxu0 0.0
        %409 = vmatpush1.msra.mxu0 0.0
        %410 = vmatprep.subr.mxu0 0.0
        %411 = vmatpush1.msra.mxu0 0.0
        %412 = vmatprep.subr.mxu0 0.0
        %413 = vmatpush1.msra.mxu0 0.0
        %414 = vmatprep.subr.mxu0 0.0
        %415 = vmatpush1.msra.mxu0 0.0
        %416 = vmatprep.mubr.f32.mxu0 0.0
        %417 = vmatmul.mubr.f32.gmra.mrb[0].mxu0 %v305
        %v418 = vpop.f32.mrb[0].mxu0
        %v419 = vadd.f32 0.0, %v418
        %v420 = vpop.f32.mrb[0].mxu0
        %421 = vmatprep.mubr.f32.mxu0 0.0
        %422 = vmatmul.mubr.f32.gmra.mrb[0].mxu0 %v308
        %v423 = vpop.f32.mrb[0].mxu0
        %v424 = vadd.f32 0.0, %v423
        %v425 = vpop.f32.mrb[0].mxu0
        %426 = vmatprep.mubr.f32.mxu0 0.0
        %427 = vmatmul.mubr.f32.gmra.mrb[0].mxu0 %v311
        %v428 = vpop.f32.mrb[0].mxu0
        %v429 = vadd.f32 0.0, %v428
        %v430 = vpop.f32.mrb[0].mxu0
        %431 = vmatprep.mubr.f32.mxu0 0.0
        %432 = vmatmul.mubr.f32.gmra.mrb[0].mxu0 %v314
        %v433 = vpop.f32.mrb[0].mxu0
        %v434 = vadd.f32 0.0, %v433
        %v435 = vpop.f32.mrb[0].mxu0
        %436 = vmatprep.mubr.f32.mxu0 0.0
        %437 = vmatmul.mubr.f32.gmra.mrb[0].mxu0 %v317
        %v438 = vpop.f32.mrb[0].mxu0
        %v439 = vadd.f32 0.0, %v438
        %v440 = vpop.f32.mrb[0].mxu0
        %441 = vmatprep.mubr.f32.mxu0 0.0
        %442 = vmatmul.mubr.f32.gmra.mrb[0].mxu0 %v320
        %v443 = vpop.f32.mrb[0].mxu0
        %v444 = vadd.f32 0.0, %v443
        %v445 = vpop.f32.mrb[0].mxu0
        %446 = vmatprep.mubr.f32.mxu0 0.0
        %447 = vmatmul.mubr.f32.gmra.mrb[0].mxu0 %v323
        %v448 = vpop.f32.mrb[0].mxu0
        %v449 = vadd.f32 0.0, %v448
        %v450 = vpop.f32.mrb[0].mxu0
        %451 = vmatprep.mubr.f32.mxu0 0.0
        %452 = vmatmul.mubr.f32.gmra.mrb[0].mxu0 %v326
        %v453 = vpop.f32.mrb[0].mxu0
        %v454 = vadd.f32 0.0, %v453
        %v455 = vpop.f32.mrb[0].mxu0
        %456 = vmatprep.mubr.f32.mxu0 0.0
        %457 = vmatmul.mubr.f32.gmra.mrb[0].mxu0 %v329
        %v458 = vpop.f32.mrb[0].mxu0
        %v459 = vadd.f32 0.0, %v458
        %v460 = vpop.f32.mrb[0].mxu0
        %461 = vmatprep.mubr.f32.mxu0 0.0
        %462 = vmatmul.mubr.f32.gmra.mrb[0].mxu0 %v332
        %v463 = vpop.f32.mrb[0].mxu0
        %v464 = vadd.f32 0.0, %v463
        %v465 = vpop.f32.mrb[0].mxu0
        %466 = vmatprep.mubr.f32.mxu0 0.0
        %467 = vmatmul.mubr.f32.gmra.mrb[0].mxu0 %v335
        %v468 = vpop.f32.mrb[0].mxu0
        %v469 = vadd.f32 0.0, %v468
        %v470 = vpop.f32.mrb[0].mxu0
        %471 = vmatprep.mubr.f32.mxu0 0.0
        %472 = vmatmul.mubr.f32.gmra.mrb[0].mxu0 %v338
        %v473 = vpop.f32.mrb[0].mxu0
        %v474 = vadd.f32 0.0, %v473
        %v475 = vpop.f32.mrb[0].mxu0
        %476 = vmatprep.mubr.f32.mxu0 0.0
        %477 = vmatmul.mubr.f32.gmra.mrb[0].mxu0 %v341
        %v478 = vpop.f32.mrb[0].mxu0
        %v479 = vadd.f32 0.0, %v478
        %v480 = vpop.f32.mrb[0].mxu0
        %481 = vmatprep.mubr.f32.mxu0 0.0
        %482 = vmatmul.mubr.f32.gmra.mrb[0].mxu0 %v344
        %v483 = vpop.f32.mrb[0].mxu0
        %v484 = vadd.f32 0.0, %v483
        %v485 = vpop.f32.mrb[0].mxu0
        %486 = vmatprep.mubr.f32.mxu0 0.0
        %487 = vmatmul.mubr.f32.gmra.mrb[0].mxu0 %v347
        %v488 = vpop.f32.mrb[0].mxu0
        %v489 = vadd.f32 0.0, %v488
        %v490 = vpop.f32.mrb[0].mxu0
        %491 = vmatprep.mubr.f32.mxu0 0.0
        %492 = vmatmul.mubr.f32.gmra.mrb[0].mxu0 %v350
        %v493 = vpop.f32.mrb[0].mxu0
        %v494 = vadd.f32 0.0, %v493
        %v495 = vpop.f32.mrb[0].mxu0
        %496 = vdwg.mxu0
        %v497 = vmul.f32 %v419, 2.0
        %v498 = vmul.f32 %v424, 2.0
        %v499 = vmul.f32 %v429, 2.0
        %v500 = vmul.f32 %v434, 2.0
        %v501 = vmul.f32 %v439, 2.0
        %v502 = vmul.f32 %v444, 2.0
        %v503 = vmul.f32 %v449, 2.0
        %v504 = vmul.f32 %v454, 2.0
        %v505 = vmul.f32 %v459, 2.0
        %v506 = vmul.f32 %v464, 2.0
        %v507 = vmul.f32 %v469, 2.0
        %v508 = vmul.f32 %v474, 2.0
        %v509 = vmul.f32 %v479, 2.0
        %v510 = vmul.f32 %v484, 2.0
        %v511 = vmul.f32 %v489, 2.0
        %v512 = vmul.f32 %v494, 2.0
        %v514 = vlaneseq
        %v515 = vshrl.u32 %v514, 7
        %v516 = vsub.s32 0, %v515
        %v517 = vrot.slane %v302, %v516
        %v519 = vsub.f32 %v517, %v497
        %v520 = vsub.f32 %v517, %v498
        %v521 = vsub.f32 %v517, %v499
        %v522 = vsub.f32 %v517, %v500
        %v523 = vsub.f32 %v517, %v501
        %v524 = vsub.f32 %v517, %v502
        %v525 = vsub.f32 %v517, %v503
        %v526 = vsub.f32 %v517, %v504
        %v527 = vsub.f32 %v517, %v505
        %v528 = vsub.f32 %v517, %v506
        %v529 = vsub.f32 %v517, %v507
        %v530 = vsub.f32 %v517, %v508
        %v531 = vsub.f32 %v517, %v509
        %v532 = vsub.f32 %v517, %v510
        %v533 = vsub.f32 %v517, %v511
        %v534 = vsub.f32 %v517, %v512
        %vm535 = vcmask 523264
        %v536 = vsel %vm535, %v519, inf
        %537 = vmin.xlane.f32.xlu0 %v536
        %v538 = vpop.xlane.xlu0 %537
        %v539 = vsel %vm535, %v520, inf
        %540 = vmin.xlane.f32.xlu0 %v539
        %v541 = vpop.xlane.xlu0 %540
        %v542 = vsel %vm535, %v521, inf
        %543 = vmin.xlane.f32.xlu0 %v542
        %v544 = vpop.xlane.xlu0 %543
        %v545 = vsel %vm535, %v522, inf
        %546 = vmin.xlane.f32.xlu0 %v545
        %v547 = vpop.xlane.xlu0 %546
        %v548 = vsel %vm535, %v523, inf
        %549 = vmin.xlane.f32.xlu0 %v548
        %v550 = vpop.xlane.xlu0 %549
        %v551 = vsel %vm535, %v524, inf
        %552 = vmin.xlane.f32.xlu0 %v551
        %v553 = vpop.xlane.xlu0 %552
        %v554 = vsel %vm535, %v525, inf
        %555 = vmin.xlane.f32.xlu0 %v554
        %v556 = vpop.xlane.xlu0 %555
        %v557 = vsel %vm535, %v526, inf
        %558 = vmin.xlane.f32.xlu0 %v557
        %v559 = vpop.xlane.xlu0 %558
        %v560 = vsel %vm535, %v527, inf
        %561 = vmin.xlane.f32.xlu0 %v560
        %v562 = vpop.xlane.xlu0 %561
        %v563 = vsel %vm535, %v528, inf
        %564 = vmin.xlane.f32.xlu0 %v563
        %v565 = vpop.xlane.xlu0 %564
        %v566 = vsel %vm535, %v529, inf
        %567 = vmin.xlane.f32.xlu0 %v566
        %v568 = vpop.xlane.xlu0 %567
        %v569 = vsel %vm535, %v530, inf
        %570 = vmin.xlane.f32.xlu0 %v569
        %v571 = vpop.xlane.xlu0 %570
        %v572 = vsel %vm535, %v531, inf
        %573 = vmin.xlane.f32.xlu0 %v572
        %v574 = vpop.xlane.xlu0 %573
        %v575 = vsel %vm535, %v532, inf
        %576 = vmin.xlane.f32.xlu0 %v575
        %v577 = vpop.xlane.xlu0 %576
        %v578 = vsel %vm535, %v533, inf
        %579 = vmin.xlane.f32.xlu0 %v578
        %v580 = vpop.xlane.xlu0 %579
        %v581 = vsel %vm535, %v534, inf
        %582 = vmin.xlane.f32.xlu0 %v581
        %v583 = vpop.xlane.xlu0 %582
        %v584 = vlaneseq
        %v585 = vand.u32 %v584, 127
        %vm586 = vcmp.eq.f32.partialorder %v519, %v538
        %vm587 = vcmp.eq.f32.partialorder %v520, %v541
        %vm588 = vcmp.eq.f32.partialorder %v521, %v544
        %vm589 = vcmp.eq.f32.partialorder %v522, %v547
        %vm590 = vcmp.eq.f32.partialorder %v523, %v550
        %vm591 = vcmp.eq.f32.partialorder %v524, %v553
        %vm592 = vcmp.eq.f32.partialorder %v525, %v556
        %vm593 = vcmp.eq.f32.partialorder %v526, %v559
        %vm594 = vcmp.eq.f32.partialorder %v527, %v562
        %vm595 = vcmp.eq.f32.partialorder %v528, %v565
        %vm596 = vcmp.eq.f32.partialorder %v529, %v568
        %vm597 = vcmp.eq.f32.partialorder %v530, %v571
        %vm598 = vcmp.eq.f32.partialorder %v531, %v574
        %vm599 = vcmp.eq.f32.partialorder %v532, %v577
        %vm600 = vcmp.eq.f32.partialorder %v533, %v580
        %vm601 = vcmp.eq.f32.partialorder %v534, %v583
        %v602 = vsel %vm586, %v585, 64
        %v603 = vsel %vm587, %v585, 64
        %v604 = vsel %vm588, %v585, 64
        %v605 = vsel %vm589, %v585, 64
        %v606 = vsel %vm590, %v585, 64
        %v607 = vsel %vm591, %v585, 64
        %v608 = vsel %vm592, %v585, 64
        %v609 = vsel %vm593, %v585, 64
        %v610 = vsel %vm594, %v585, 64
        %v611 = vsel %vm595, %v585, 64
        %v612 = vsel %vm596, %v585, 64
        %v613 = vsel %vm597, %v585, 64
        %v614 = vsel %vm598, %v585, 64
        %v615 = vsel %vm599, %v585, 64
        %v616 = vsel %vm600, %v585, 64
        %v617 = vsel %vm601, %v585, 64
        %v618 = vsel %vm535, %v602, 2147483647
        %v619 = vand.u32 %v618, 65535
        %v620 = vshra.s32 %v618, 16
        %v621 = vcvt.s32.f32 %v619
        %v622 = vcvt.s32.f32 %v620
        %623 = vmin.xlane.f32.xlu0 %v622
        %v624 = vpop.xlane.xlu0 %623
        %vm625 = vcmp.eq.f32.partialorder %v622, %v624
        %v626 = vsel %vm625, %v621, inf
        %627 = vmin.xlane.f32.xlu0 %v626
        %v628 = vpop.xlane.xlu0 %627
        %v629 = vcvt.f32.s32 %v628
        %v630 = vcvt.f32.s32 %v624
        %v631 = vshll.u32 %v630, 16
        %v632 = vadd.s32 %v631, %v629
        %v633 = vsel %vm535, %v603, 2147483647
        %v634 = vand.u32 %v633, 65535
        %v635 = vshra.s32 %v633, 16
        %v636 = vcvt.s32.f32 %v634
        %v637 = vcvt.s32.f32 %v635
        %638 = vmin.xlane.f32.xlu0 %v637
        %v639 = vpop.xlane.xlu0 %638
        %vm640 = vcmp.eq.f32.partialorder %v637, %v639
        %v641 = vsel %vm640, %v636, inf
        %642 = vmin.xlane.f32.xlu0 %v641
        %v643 = vpop.xlane.xlu0 %642
        %v644 = vcvt.f32.s32 %v643
        %v645 = vcvt.f32.s32 %v639
        %v646 = vshll.u32 %v645, 16
        %v647 = vadd.s32 %v646, %v644
        %v648 = vsel %vm535, %v604, 2147483647
        %v649 = vand.u32 %v648, 65535
        %v650 = vshra.s32 %v648, 16
        %v651 = vcvt.s32.f32 %v649
        %v652 = vcvt.s32.f32 %v650
        %653 = vmin.xlane.f32.xlu0 %v652
        %v654 = vpop.xlane.xlu0 %653
        %vm655 = vcmp.eq.f32.partialorder %v652, %v654
        %v656 = vsel %vm655, %v651, inf
        %657 = vmin.xlane.f32.xlu0 %v656
        %v658 = vpop.xlane.xlu0 %657
        %v659 = vcvt.f32.s32 %v658
        %v660 = vcvt.f32.s32 %v654
        %v661 = vshll.u32 %v660, 16
        %v662 = vadd.s32 %v661, %v659
        %v663 = vsel %vm535, %v605, 2147483647
        %v664 = vand.u32 %v663, 65535
        %v665 = vshra.s32 %v663, 16
        %v666 = vcvt.s32.f32 %v664
        %v667 = vcvt.s32.f32 %v665
        %668 = vmin.xlane.f32.xlu0 %v667
        %v669 = vpop.xlane.xlu0 %668
        %vm670 = vcmp.eq.f32.partialorder %v667, %v669
        %v671 = vsel %vm670, %v666, inf
        %672 = vmin.xlane.f32.xlu0 %v671
        %v673 = vpop.xlane.xlu0 %672
        %v674 = vcvt.f32.s32 %v673
        %v675 = vcvt.f32.s32 %v669
        %v676 = vshll.u32 %v675, 16
        %v677 = vadd.s32 %v676, %v674
        %v678 = vsel %vm535, %v606, 2147483647
        %v679 = vand.u32 %v678, 65535
        %v680 = vshra.s32 %v678, 16
        %v681 = vcvt.s32.f32 %v679
        %v682 = vcvt.s32.f32 %v680
        %683 = vmin.xlane.f32.xlu0 %v682
        %v684 = vpop.xlane.xlu0 %683
        %vm685 = vcmp.eq.f32.partialorder %v682, %v684
        %v686 = vsel %vm685, %v681, inf
        %687 = vmin.xlane.f32.xlu0 %v686
        %v688 = vpop.xlane.xlu0 %687
        %v689 = vcvt.f32.s32 %v688
        %v690 = vcvt.f32.s32 %v684
        %v691 = vshll.u32 %v690, 16
        %v692 = vadd.s32 %v691, %v689
        %v693 = vsel %vm535, %v607, 2147483647
        %v694 = vand.u32 %v693, 65535
        %v695 = vshra.s32 %v693, 16
        %v696 = vcvt.s32.f32 %v694
        %v697 = vcvt.s32.f32 %v695
        %698 = vmin.xlane.f32.xlu0 %v697
        %v699 = vpop.xlane.xlu0 %698
        %vm700 = vcmp.eq.f32.partialorder %v697, %v699
        %v701 = vsel %vm700, %v696, inf
        %702 = vmin.xlane.f32.xlu0 %v701
        %v703 = vpop.xlane.xlu0 %702
        %v704 = vcvt.f32.s32 %v703
        %v705 = vcvt.f32.s32 %v699
        %v706 = vshll.u32 %v705, 16
        %v707 = vadd.s32 %v706, %v704
        %v708 = vsel %vm535, %v608, 2147483647
        %v709 = vand.u32 %v708, 65535
        %v710 = vshra.s32 %v708, 16
        %v711 = vcvt.s32.f32 %v709
        %v712 = vcvt.s32.f32 %v710
        %713 = vmin.xlane.f32.xlu0 %v712
        %v714 = vpop.xlane.xlu0 %713
        %vm715 = vcmp.eq.f32.partialorder %v712, %v714
        %v716 = vsel %vm715, %v711, inf
        %717 = vmin.xlane.f32.xlu0 %v716
        %v718 = vpop.xlane.xlu0 %717
        %v719 = vcvt.f32.s32 %v718
        %v720 = vcvt.f32.s32 %v714
        %v721 = vshll.u32 %v720, 16
        %v722 = vadd.s32 %v721, %v719
        %v723 = vsel %vm535, %v609, 2147483647
        %v724 = vand.u32 %v723, 65535
        %v725 = vshra.s32 %v723, 16
        %v726 = vcvt.s32.f32 %v724
        %v727 = vcvt.s32.f32 %v725
        %728 = vmin.xlane.f32.xlu0 %v727
        %v729 = vpop.xlane.xlu0 %728
        %vm730 = vcmp.eq.f32.partialorder %v727, %v729
        %v731 = vsel %vm730, %v726, inf
        %732 = vmin.xlane.f32.xlu0 %v731
        %v733 = vpop.xlane.xlu0 %732
        %v734 = vcvt.f32.s32 %v733
        %v735 = vcvt.f32.s32 %v729
        %v736 = vshll.u32 %v735, 16
        %v737 = vadd.s32 %v736, %v734
        %v738 = vsel %vm535, %v610, 2147483647
        %v739 = vand.u32 %v738, 65535
        %v740 = vshra.s32 %v738, 16
        %v741 = vcvt.s32.f32 %v739
        %v742 = vcvt.s32.f32 %v740
        %743 = vmin.xlane.f32.xlu0 %v742
        %v744 = vpop.xlane.xlu0 %743
        %vm745 = vcmp.eq.f32.partialorder %v742, %v744
        %v746 = vsel %vm745, %v741, inf
        %747 = vmin.xlane.f32.xlu0 %v746
        %v748 = vpop.xlane.xlu0 %747
        %v749 = vcvt.f32.s32 %v748
        %v750 = vcvt.f32.s32 %v744
        %v751 = vshll.u32 %v750, 16
        %v752 = vadd.s32 %v751, %v749
        %v753 = vsel %vm535, %v611, 2147483647
        %v754 = vand.u32 %v753, 65535
        %v755 = vshra.s32 %v753, 16
        %v756 = vcvt.s32.f32 %v754
        %v757 = vcvt.s32.f32 %v755
        %758 = vmin.xlane.f32.xlu0 %v757
        %v759 = vpop.xlane.xlu0 %758
        %vm760 = vcmp.eq.f32.partialorder %v757, %v759
        %v761 = vsel %vm760, %v756, inf
        %762 = vmin.xlane.f32.xlu0 %v761
        %v763 = vpop.xlane.xlu0 %762
        %v764 = vcvt.f32.s32 %v763
        %v765 = vcvt.f32.s32 %v759
        %v766 = vshll.u32 %v765, 16
        %v767 = vadd.s32 %v766, %v764
        %v768 = vsel %vm535, %v612, 2147483647
        %v769 = vand.u32 %v768, 65535
        %v770 = vshra.s32 %v768, 16
        %v771 = vcvt.s32.f32 %v769
        %v772 = vcvt.s32.f32 %v770
        %773 = vmin.xlane.f32.xlu0 %v772
        %v774 = vpop.xlane.xlu0 %773
        %vm775 = vcmp.eq.f32.partialorder %v772, %v774
        %v776 = vsel %vm775, %v771, inf
        %777 = vmin.xlane.f32.xlu0 %v776
        %v778 = vpop.xlane.xlu0 %777
        %v779 = vcvt.f32.s32 %v778
        %v780 = vcvt.f32.s32 %v774
        %v781 = vshll.u32 %v780, 16
        %v782 = vadd.s32 %v781, %v779
        %v783 = vsel %vm535, %v613, 2147483647
        %v784 = vand.u32 %v783, 65535
        %v785 = vshra.s32 %v783, 16
        %v786 = vcvt.s32.f32 %v784
        %v787 = vcvt.s32.f32 %v785
        %788 = vmin.xlane.f32.xlu0 %v787
        %v789 = vpop.xlane.xlu0 %788
        %vm790 = vcmp.eq.f32.partialorder %v787, %v789
        %v791 = vsel %vm790, %v786, inf
        %792 = vmin.xlane.f32.xlu0 %v791
        %v793 = vpop.xlane.xlu0 %792
        %v794 = vcvt.f32.s32 %v793
        %v795 = vcvt.f32.s32 %v789
        %v796 = vshll.u32 %v795, 16
        %v797 = vadd.s32 %v796, %v794
        %v798 = vsel %vm535, %v614, 2147483647
        %v799 = vand.u32 %v798, 65535
        %v800 = vshra.s32 %v798, 16
        %v801 = vcvt.s32.f32 %v799
        %v802 = vcvt.s32.f32 %v800
        %803 = vmin.xlane.f32.xlu0 %v802
        %v804 = vpop.xlane.xlu0 %803
        %vm805 = vcmp.eq.f32.partialorder %v802, %v804
        %v806 = vsel %vm805, %v801, inf
        %807 = vmin.xlane.f32.xlu0 %v806
        %v808 = vpop.xlane.xlu0 %807
        %v809 = vcvt.f32.s32 %v808
        %v810 = vcvt.f32.s32 %v804
        %v811 = vshll.u32 %v810, 16
        %v812 = vadd.s32 %v811, %v809
        %v813 = vsel %vm535, %v615, 2147483647
        %v814 = vand.u32 %v813, 65535
        %v815 = vshra.s32 %v813, 16
        %v816 = vcvt.s32.f32 %v814
        %v817 = vcvt.s32.f32 %v815
        %818 = vmin.xlane.f32.xlu0 %v817
        %v819 = vpop.xlane.xlu0 %818
        %vm820 = vcmp.eq.f32.partialorder %v817, %v819
        %v821 = vsel %vm820, %v816, inf
        %822 = vmin.xlane.f32.xlu0 %v821
        %v823 = vpop.xlane.xlu0 %822
        %v824 = vcvt.f32.s32 %v823
        %v825 = vcvt.f32.s32 %v819
        %v826 = vshll.u32 %v825, 16
        %v827 = vadd.s32 %v826, %v824
        %v828 = vsel %vm535, %v616, 2147483647
        %v829 = vand.u32 %v828, 65535
        %v830 = vshra.s32 %v828, 16
        %v831 = vcvt.s32.f32 %v829
        %v832 = vcvt.s32.f32 %v830
        %833 = vmin.xlane.f32.xlu0 %v832
        %v834 = vpop.xlane.xlu0 %833
        %vm835 = vcmp.eq.f32.partialorder %v832, %v834
        %v836 = vsel %vm835, %v831, inf
        %837 = vmin.xlane.f32.xlu0 %v836
        %v838 = vpop.xlane.xlu0 %837
        %v839 = vcvt.f32.s32 %v838
        %v840 = vcvt.f32.s32 %v834
        %v841 = vshll.u32 %v840, 16
        %v842 = vadd.s32 %v841, %v839
        %v843 = vsel %vm535, %v617, 2147483647
        %v844 = vand.u32 %v843, 65535
        %v845 = vshra.s32 %v843, 16
        %v846 = vcvt.s32.f32 %v844
        %v847 = vcvt.s32.f32 %v845
        %848 = vmin.xlane.f32.xlu0 %v847
        %v849 = vpop.xlane.xlu0 %848
        %vm850 = vcmp.eq.f32.partialorder %v847, %v849
        %v851 = vsel %vm850, %v846, inf
        %852 = vmin.xlane.f32.xlu0 %v851
        %v853 = vpop.xlane.xlu0 %852
        %v854 = vcvt.f32.s32 %v853
        %v855 = vcvt.f32.s32 %v849
        %v856 = vshll.u32 %v855, 16
        %v857 = vadd.s32 %v856, %v854
        %vm858 = vcmp.eq.s32.totalorder %v585, %v632
        %vm859 = vcmp.eq.s32.totalorder %v585, %v647
        %vm860 = vcmp.eq.s32.totalorder %v585, %v662
        %vm861 = vcmp.eq.s32.totalorder %v585, %v677
        %vm862 = vcmp.eq.s32.totalorder %v585, %v692
        %vm863 = vcmp.eq.s32.totalorder %v585, %v707
        %vm864 = vcmp.eq.s32.totalorder %v585, %v722
        %vm865 = vcmp.eq.s32.totalorder %v585, %v737
        %vm866 = vcmp.eq.s32.totalorder %v585, %v752
        %vm867 = vcmp.eq.s32.totalorder %v585, %v767
        %vm868 = vcmp.eq.s32.totalorder %v585, %v782
        %vm869 = vcmp.eq.s32.totalorder %v585, %v797
        %vm870 = vcmp.eq.s32.totalorder %v585, %v812
        %vm871 = vcmp.eq.s32.totalorder %v585, %v827
        %vm872 = vcmp.eq.s32.totalorder %v585, %v842
        %vm873 = vcmp.eq.s32.totalorder %v585, %v857
        %v874 = vsel %vm858, 1, 0
        %v875 = vsel %vm859, 1, 0
        %v876 = vsel %vm860, 1, 0
        %v877 = vsel %vm861, 1, 0
        %v878 = vsel %vm862, 1, 0
        %v879 = vsel %vm863, 1, 0
        %v880 = vsel %vm864, 1, 0
        %v881 = vsel %vm865, 1, 0
        %v882 = vsel %vm866, 1, 0
        %v883 = vsel %vm867, 1, 0
        %v884 = vsel %vm868, 1, 0
        %v885 = vsel %vm869, 1, 0
        %v886 = vsel %vm870, 1, 0
        %v887 = vsel %vm871, 1, 0
        %v888 = vsel %vm872, 1, 0
        %v889 = vsel %vm873, 1, 0
        %v890 = vcvt.s32.f32 %v874
        %v891 = vcvt.s32.f32 %v875
        %v892 = vcvt.s32.f32 %v876
        %v893 = vcvt.s32.f32 %v877
        %v894 = vcvt.s32.f32 %v878
        %v895 = vcvt.s32.f32 %v879
        %v896 = vcvt.s32.f32 %v880
        %v897 = vcvt.s32.f32 %v881
        %v898 = vcvt.s32.f32 %v882
        %v899 = vcvt.s32.f32 %v883
        %v900 = vcvt.s32.f32 %v884
        %v901 = vcvt.s32.f32 %v885
        %v902 = vcvt.s32.f32 %v886
        %v903 = vcvt.s32.f32 %v887
        %v904 = vcvt.s32.f32 %v888
        %v905 = vcvt.s32.f32 %v889
        %v907 = vsel %vm535, %v890, 0
        %v910 = vsel %vm535, %v891, 0
        %v913 = vsel %vm535, %v892, 0
        %v916 = vsel %vm535, %v893, 0
        %v919 = vsel %vm535, %v894, 0
        %v922 = vsel %vm535, %v895, 0
        %v925 = vsel %vm535, %v896, 0
        %v928 = vsel %vm535, %v897, 0
        %v931 = vsel %vm535, %v898, 0
        %v934 = vsel %vm535, %v899, 0
        %v937 = vsel %vm535, %v900, 0
        %v940 = vsel %vm535, %v901, 0
        %v943 = vsel %vm535, %v902, 0
        %v946 = vsel %vm535, %v903, 0
        %v949 = vsel %vm535, %v904, 0
        %v952 = vsel %vm535, %v905, 0
        %954 = vmatprep.subr.mxu0 0.0
        %955 = vmatpush1.msra.mxu0 %v294
        %956 = vmatprep.subr.mxu0 0.0
        %957 = vmatpush1.msra.mxu0 %v295
        %958 = vmatprep.subr.mxu0 0.0
        %959 = vmatpush1.msra.mxu0 %v296
        %960 = vmatprep.subr.mxu0 0.0
        %961 = vmatpush1.msra.mxu0 %v297
        %962 = vmatprep.subr.mxu0 0.0
        %963 = vmatpush1.msra.mxu0 %v298
        %964 = vmatprep.subr.mxu0 0.0
        %965 = vmatpush1.msra.mxu0 %v299
        %966 = vmatprep.subr.mxu0 0.0
        %967 = vmatpush1.msra.mxu0 %v300
        %968 = vmatprep.subr.mxu0 0.0
        %969 = vmatpush1.msra.mxu0 %v301
        %970 = vmatprep.subr.mxu0 0.0
        %971 = vmatpush1.msra.mxu0 0.0
        %972 = vmatprep.subr.mxu0 0.0
        %973 = vmatpush1.msra.mxu0 0.0
        %974 = vmatprep.subr.mxu0 0.0
        %975 = vmatpush1.msra.mxu0 0.0
        %976 = vmatprep.subr.mxu0 0.0
        %977 = vmatpush1.msra.mxu0 0.0
        %978 = vmatprep.subr.mxu0 0.0
        %979 = vmatpush1.msra.mxu0 0.0
        %980 = vmatprep.subr.mxu0 0.0
        %981 = vmatpush1.msra.mxu0 0.0
        %982 = vmatprep.subr.mxu0 0.0
        %983 = vmatpush1.msra.mxu0 0.0
        %984 = vmatprep.subr.mxu0 0.0
        %985 = vmatpush1.msra.mxu0 0.0
        %986 = vmatprep.subr.mxu0 0.0
        %987 = vmatpush1.msra.mxu0 0.0
        %988 = vmatprep.subr.mxu0 0.0
        %989 = vmatpush1.msra.mxu0 0.0
        %990 = vmatprep.subr.mxu0 0.0
        %991 = vmatpush1.msra.mxu0 0.0
        %992 = vmatprep.subr.mxu0 0.0
        %993 = vmatpush1.msra.mxu0 0.0
        %994 = vmatprep.subr.mxu0 0.0
        %995 = vmatpush1.msra.mxu0 0.0
        %996 = vmatprep.subr.mxu0 0.0
        %997 = vmatpush1.msra.mxu0 0.0
        %998 = vmatprep.subr.mxu0 0.0
        %999 = vmatpush1.msra.mxu0 0.0
        %1000 = vmatprep.subr.mxu0 0.0
        %1001 = vmatpush1.msra.mxu0 0.0
        %1002 = vmatprep.subr.mxu0 0.0
        %1003 = vmatpush1.msra.mxu0 0.0
        %1004 = vmatprep.subr.mxu0 0.0
        %1005 = vmatpush1.msra.mxu0 0.0
        %1006 = vmatprep.subr.mxu0 0.0
        %1007 = vmatpush1.msra.mxu0 0.0
        %1008 = vmatprep.subr.mxu0 0.0
        %1009 = vmatpush1.msra.mxu0 0.0
        %1010 = vmatprep.subr.mxu0 0.0
        %1011 = vmatpush1.msra.mxu0 0.0
        %1012 = vmatprep.subr.mxu0 0.0
        %1013 = vmatpush1.msra.mxu0 0.0
        %1014 = vmatprep.subr.mxu0 0.0
        %1015 = vmatpush1.msra.mxu0 0.0
        %1016 = vmatprep.subr.mxu0 0.0
        %1017 = vmatpush1.msra.mxu0 0.0
        %1018 = vmatprep.mubr.f32.mxu0 0.0
        %1019 = vmatmul.mubr.f32.gmra.mrb[0].mxu0 %v907
        %v1020 = vpop.f32.mrb[0].mxu0
        %v1021 = vadd.f32 0.0, %v1020
        %v1022 = vpop.f32.mrb[0].mxu0
        %1023 = vmatprep.mubr.f32.mxu0 0.0
        %1024 = vmatmul.mubr.f32.gmra.mrb[0].mxu0 %v910
        %v1025 = vpop.f32.mrb[0].mxu0
        %v1026 = vadd.f32 0.0, %v1025
        %v1027 = vpop.f32.mrb[0].mxu0
        %1028 = vmatprep.mubr.f32.mxu0 0.0
        %1029 = vmatmul.mubr.f32.gmra.mrb[0].mxu0 %v913
        %v1030 = vpop.f32.mrb[0].mxu0
        %v1031 = vadd.f32 0.0, %v1030
        %v1032 = vpop.f32.mrb[0].mxu0
        %1033 = vmatprep.mubr.f32.mxu0 0.0
        %1034 = vmatmul.mubr.f32.gmra.mrb[0].mxu0 %v916
        %v1035 = vpop.f32.mrb[0].mxu0
        %v1036 = vadd.f32 0.0, %v1035
        %v1037 = vpop.f32.mrb[0].mxu0
        %1038 = vmatprep.mubr.f32.mxu0 0.0
        %1039 = vmatmul.mubr.f32.gmra.mrb[0].mxu0 %v919
        %v1040 = vpop.f32.mrb[0].mxu0
        %v1041 = vadd.f32 0.0, %v1040
        %v1042 = vpop.f32.mrb[0].mxu0
        %1043 = vmatprep.mubr.f32.mxu0 0.0
        %1044 = vmatmul.mubr.f32.gmra.mrb[0].mxu0 %v922
        %v1045 = vpop.f32.mrb[0].mxu0
        %v1046 = vadd.f32 0.0, %v1045
        %v1047 = vpop.f32.mrb[0].mxu0
        %1048 = vmatprep.mubr.f32.mxu0 0.0
        %1049 = vmatmul.mubr.f32.gmra.mrb[0].mxu0 %v925
        %v1050 = vpop.f32.mrb[0].mxu0
        %v1051 = vadd.f32 0.0, %v1050
        %v1052 = vpop.f32.mrb[0].mxu0
        %1053 = vmatprep.mubr.f32.mxu0 0.0
        %1054 = vmatmul.mubr.f32.gmra.mrb[0].mxu0 %v928
        %v1055 = vpop.f32.mrb[0].mxu0
        %v1056 = vadd.f32 0.0, %v1055
        %v1057 = vpop.f32.mrb[0].mxu0
        %1058 = vmatprep.mubr.f32.mxu0 0.0
        %1059 = vmatmul.mubr.f32.gmra.mrb[0].mxu0 %v931
        %v1060 = vpop.f32.mrb[0].mxu0
        %v1061 = vadd.f32 0.0, %v1060
        %v1062 = vpop.f32.mrb[0].mxu0
        %1063 = vmatprep.mubr.f32.mxu0 0.0
        %1064 = vmatmul.mubr.f32.gmra.mrb[0].mxu0 %v934
        %v1065 = vpop.f32.mrb[0].mxu0
        %v1066 = vadd.f32 0.0, %v1065
        %v1067 = vpop.f32.mrb[0].mxu0
        %1068 = vmatprep.mubr.f32.mxu0 0.0
        %1069 = vmatmul.mubr.f32.gmra.mrb[0].mxu0 %v937
        %v1070 = vpop.f32.mrb[0].mxu0
        %v1071 = vadd.f32 0.0, %v1070
        %v1072 = vpop.f32.mrb[0].mxu0
        %1073 = vmatprep.mubr.f32.mxu0 0.0
        %1074 = vmatmul.mubr.f32.gmra.mrb[0].mxu0 %v940
        %v1075 = vpop.f32.mrb[0].mxu0
        %v1076 = vadd.f32 0.0, %v1075
        %v1077 = vpop.f32.mrb[0].mxu0
        %1078 = vmatprep.mubr.f32.mxu0 0.0
        %1079 = vmatmul.mubr.f32.gmra.mrb[0].mxu0 %v943
        %v1080 = vpop.f32.mrb[0].mxu0
        %v1081 = vadd.f32 0.0, %v1080
        %v1082 = vpop.f32.mrb[0].mxu0
        %1083 = vmatprep.mubr.f32.mxu0 0.0
        %1084 = vmatmul.mubr.f32.gmra.mrb[0].mxu0 %v946
        %v1085 = vpop.f32.mrb[0].mxu0
        %v1086 = vadd.f32 0.0, %v1085
        %v1087 = vpop.f32.mrb[0].mxu0
        %1088 = vmatprep.mubr.f32.mxu0 0.0
        %1089 = vmatmul.mubr.f32.gmra.mrb[0].mxu0 %v949
        %v1090 = vpop.f32.mrb[0].mxu0
        %v1091 = vadd.f32 0.0, %v1090
        %v1092 = vpop.f32.mrb[0].mxu0
        %1093 = vmatprep.mubr.f32.mxu0 0.0
        %1094 = vmatmul.mubr.f32.gmra.mrb[0].mxu0 %v952
        %v1095 = vpop.f32.mrb[0].mxu0
        %v1096 = vadd.f32 0.0, %v1095
        %v1097 = vpop.f32.mrb[0].mxu0
        %1098 = vdwg.mxu0
        %1099 = vst.msk [vmem:[%s272] sm:$0xff] %vm303, %v1021
        %1100 = vst.msk [vmem:[%s272 + $0x8] sm:$0xff] %vm303, %v1026
        %1101 = vst.msk [vmem:[%s272 + $0x10] sm:$0xff] %vm303, %v1031
        %1102 = vst.msk [vmem:[%s272 + $0x18] sm:$0xff] %vm303, %v1036
        %1103 = vst.msk [vmem:[%s272 + $0x20] sm:$0xff] %vm303, %v1041
        %1104 = vst.msk [vmem:[%s272 + $0x28] sm:$0xff] %vm303, %v1046
        %1105 = vst.msk [vmem:[%s272 + $0x30] sm:$0xff] %vm303, %v1051
        %1106 = vst.msk [vmem:[%s272 + $0x38] sm:$0xff] %vm303, %v1056
        %1107 = vst.msk [vmem:[%s272 + $0x40] sm:$0xff] %vm303, %v1061
        %1108 = vst.msk [vmem:[%s272 + $0x48] sm:$0xff] %vm303, %v1066
        %1109 = vst.msk [vmem:[%s272 + $0x50] sm:$0xff] %vm303, %v1071
        %1110 = vst.msk [vmem:[%s272 + $0x58] sm:$0xff] %vm303, %v1076
        %1111 = vst.msk [vmem:[%s272 + $0x60] sm:$0xff] %vm303, %v1081
        %1112 = vst.msk [vmem:[%s272 + $0x68] sm:$0xff] %vm303, %v1086
        %1113 = vst.msk [vmem:[%s272 + $0x70] sm:$0xff] %vm303, %v1091
        %1114 = vst.msk [vmem:[%s272 + $0x78] sm:$0xff] %vm303, %v1096
        %v1115 = vlaneseq
        %v1116 = vshrl.u32 %v1115, 7
        %v1117 = vsub.s32 %v585, %v1116
        %v1118 = vrot.slane %v632, %v1117
        %v1119 = vadd.s32 %v585, 4294967288
        %v1120 = vlaneseq
        %v1121 = vshrl.u32 %v1120, 7
        %v1122 = vsub.s32 %v1119, %v1121
        %v1123 = vrot.slane %v647, %v1122
        %vm1124 = vcmask 130112
        %v1125 = vsel %vm1124, %v1123, %v1118
        %v1126 = vadd.s32 %v585, 4294967280
        %v1127 = vlaneseq
        %v1128 = vshrl.u32 %v1127, 7
        %v1129 = vsub.s32 %v1126, %v1128
        %v1130 = vrot.slane %v662, %v1129
        %vm1131 = vcmask 195712
        %v1132 = vsel %vm1131, %v1130, %v1125
        %v1133 = vadd.s32 %v585, 4294967272
        %v1134 = vlaneseq
        %v1135 = vshrl.u32 %v1134, 7
        %v1136 = vsub.s32 %v1133, %v1135
        %v1137 = vrot.slane %v677, %v1136
        %vm1138 = vcmask 261312
        %v1139 = vsel %vm1138, %v1137, %v1132
        %v1140 = vadd.s32 %v585, 4294967264
        %v1141 = vlaneseq
        %v1142 = vshrl.u32 %v1141, 7
        %v1143 = vsub.s32 %v1140, %v1142
        %v1144 = vrot.slane %v692, %v1143
        %vm1145 = vcmask 326912
        %v1146 = vsel %vm1145, %v1144, %v1139
        %v1147 = vadd.s32 %v585, 4294967256
        %v1148 = vlaneseq
        %v1149 = vshrl.u32 %v1148, 7
        %v1150 = vsub.s32 %v1147, %v1149
        %v1151 = vrot.slane %v707, %v1150
        %vm1152 = vcmask 392512
        %v1153 = vsel %vm1152, %v1151, %v1146
        %v1154 = vadd.s32 %v585, 4294967248
        %v1155 = vlaneseq
        %v1156 = vshrl.u32 %v1155, 7
        %v1157 = vsub.s32 %v1154, %v1156
        %v1158 = vrot.slane %v722, %v1157
        %vm1159 = vcmask 458112
        %v1160 = vsel %vm1159, %v1158, %v1153
        %v1161 = vadd.s32 %v585, 4294967240
        %v1162 = vlaneseq
        %v1163 = vshrl.u32 %v1162, 7
        %v1164 = vsub.s32 %v1161, %v1163
        %v1165 = vrot.slane %v737, %v1164
        %vm1166 = vcmask 523712
        %v1167 = vsel %vm1166, %v1165, %v1160
        %v1168 = vadd.s32 %v585, 4294967232
        %v1169 = vlaneseq
        %v1170 = vshrl.u32 %v1169, 7
        %v1171 = vsub.s32 %v1168, %v1170
        %v1172 = vrot.slane %v752, %v1171
        %vm1173 = vcmask 589312
        %v1174 = vsel %vm1173, %v1172, %v1167
        %v1175 = vadd.s32 %v585, 4294967224
        %v1176 = vlaneseq
        %v1177 = vshrl.u32 %v1176, 7
        %v1178 = vsub.s32 %v1175, %v1177
        %v1179 = vrot.slane %v767, %v1178
        %vm1180 = vcmask 654912
        %v1181 = vsel %vm1180, %v1179, %v1174
        %v1182 = vadd.s32 %v585, 4294967216
        %v1183 = vlaneseq
        %v1184 = vshrl.u32 %v1183, 7
        %v1185 = vsub.s32 %v1182, %v1184
        %v1186 = vrot.slane %v782, %v1185
        %vm1187 = vcmask 720512
        %v1188 = vsel %vm1187, %v1186, %v1181
        %v1189 = vadd.s32 %v585, 4294967208
        %v1190 = vlaneseq
        %v1191 = vshrl.u32 %v1190, 7
        %v1192 = vsub.s32 %v1189, %v1191
        %v1193 = vrot.slane %v797, %v1192
        %vm1194 = vcmask 786112
        %v1195 = vsel %vm1194, %v1193, %v1188
        %v1196 = vadd.s32 %v585, 4294967200
        %v1197 = vlaneseq
        %v1198 = vshrl.u32 %v1197, 7
        %v1199 = vsub.s32 %v1196, %v1198
        %v1200 = vrot.slane %v812, %v1199
        %vm1201 = vcmask 851712
        %v1202 = vsel %vm1201, %v1200, %v1195
        %v1203 = vadd.s32 %v585, 4294967192
        %v1204 = vlaneseq
        %v1205 = vshrl.u32 %v1204, 7
        %v1206 = vsub.s32 %v1203, %v1205
        %v1207 = vrot.slane %v827, %v1206
        %vm1208 = vcmask 917312
        %v1209 = vsel %vm1208, %v1207, %v1202
        %v1210 = vadd.s32 %v585, 4294967184
        %v1211 = vlaneseq
        %v1212 = vshrl.u32 %v1211, 7
        %v1213 = vsub.s32 %v1210, %v1212
        %v1214 = vrot.slane %v842, %v1213
        %vm1215 = vcmask 982912
        %v1216 = vsel %vm1215, %v1214, %v1209
        %v1217 = vadd.s32 %v585, 4294967176
        %v1218 = vlaneseq
        %v1219 = vshrl.u32 %v1218, 7
        %v1220 = vsub.s32 %v1217, %v1219
        %v1221 = vrot.slane %v857, %v1220
        %vm1222 = vcmask 1048512
        %v1223 = vsel %vm1222, %v1221, %v1216
        %1224 = vst [vmem:[%s255] sm:$0x1] %v1223
        %v1225 = vsub.f32 %v1021, %v274
        %v1226 = vsub.f32 %v1026, %v275
        %v1227 = vsub.f32 %v1031, %v276
        %v1228 = vsub.f32 %v1036, %v277
        %v1229 = vsub.f32 %v1041, %v278
        %v1230 = vsub.f32 %v1046, %v279
        %v1231 = vsub.f32 %v1051, %v280
        %v1232 = vsub.f32 %v1056, %v281
        %v1233 = vsub.f32 %v1061, %v282
        %v1234 = vsub.f32 %v1066, %v283
        %v1235 = vsub.f32 %v1071, %v284
        %v1236 = vsub.f32 %v1076, %v285
        %v1237 = vsub.f32 %v1081, %v286
        %v1238 = vsub.f32 %v1086, %v287
        %v1239 = vsub.f32 %v1091, %v288
        %v1240 = vsub.f32 %v1096, %v289
        %v1241 = vmul.f32 %v1225, %v1225
        %v1242 = vmul.f32 %v1226, %v1226
        %v1243 = vmul.f32 %v1227, %v1227
        %v1244 = vmul.f32 %v1228, %v1228
        %v1245 = vmul.f32 %v1229, %v1229
        %v1246 = vmul.f32 %v1230, %v1230
        %v1247 = vmul.f32 %v1231, %v1231
        %v1248 = vmul.f32 %v1232, %v1232
        %v1249 = vmul.f32 %v1233, %v1233
        %v1250 = vmul.f32 %v1234, %v1234
        %v1251 = vmul.f32 %v1235, %v1235
        %v1252 = vmul.f32 %v1236, %v1236
        %v1253 = vmul.f32 %v1237, %v1237
        %v1254 = vmul.f32 %v1238, %v1238
        %v1255 = vmul.f32 %v1239, %v1239
        %v1256 = vmul.f32 %v1240, %v1240
        %v1257 = vsel %vm303, %v1241, 0.0
        %1258 = vadd.xlane.f32.xlu0 %v1257
        %v1259 = vpop.xlane.xlu0 %1258
        %v1260 = vsel %vm303, %v1242, 0.0
        %1261 = vadd.xlane.f32.xlu0 %v1260
        %v1262 = vpop.xlane.xlu0 %1261
        %v1263 = vsel %vm303, %v1243, 0.0
        %1264 = vadd.xlane.f32.xlu0 %v1263
        %v1265 = vpop.xlane.xlu0 %1264
        %v1266 = vsel %vm303, %v1244, 0.0
        %1267 = vadd.xlane.f32.xlu0 %v1266
        %v1268 = vpop.xlane.xlu0 %1267
        %v1269 = vsel %vm303, %v1245, 0.0
        %1270 = vadd.xlane.f32.xlu0 %v1269
        %v1271 = vpop.xlane.xlu0 %1270
        %v1272 = vsel %vm303, %v1246, 0.0
        %1273 = vadd.xlane.f32.xlu0 %v1272
        %v1274 = vpop.xlane.xlu0 %1273
        %v1275 = vsel %vm303, %v1247, 0.0
        %1276 = vadd.xlane.f32.xlu0 %v1275
        %v1277 = vpop.xlane.xlu0 %1276
        %v1278 = vsel %vm303, %v1248, 0.0
        %1279 = vadd.xlane.f32.xlu0 %v1278
        %v1280 = vpop.xlane.xlu0 %1279
        %v1281 = vsel %vm303, %v1249, 0.0
        %1282 = vadd.xlane.f32.xlu0 %v1281
        %v1283 = vpop.xlane.xlu0 %1282
        %v1284 = vsel %vm303, %v1250, 0.0
        %1285 = vadd.xlane.f32.xlu0 %v1284
        %v1286 = vpop.xlane.xlu0 %1285
        %v1287 = vsel %vm303, %v1251, 0.0
        %1288 = vadd.xlane.f32.xlu0 %v1287
        %v1289 = vpop.xlane.xlu0 %1288
        %v1290 = vsel %vm303, %v1252, 0.0
        %1291 = vadd.xlane.f32.xlu0 %v1290
        %v1292 = vpop.xlane.xlu0 %1291
        %v1293 = vsel %vm303, %v1253, 0.0
        %1294 = vadd.xlane.f32.xlu0 %v1293
        %v1295 = vpop.xlane.xlu0 %1294
        %v1296 = vsel %vm303, %v1254, 0.0
        %1297 = vadd.xlane.f32.xlu0 %v1296
        %v1298 = vpop.xlane.xlu0 %1297
        %v1299 = vsel %vm303, %v1255, 0.0
        %1300 = vadd.xlane.f32.xlu0 %v1299
        %v1301 = vpop.xlane.xlu0 %1300
        %v1302 = vsel %vm303, %v1256, 0.0
        %1303 = vadd.xlane.f32.xlu0 %v1302
        %v1304 = vpop.xlane.xlu0 %1303
        %v1321 = vlaneseq
        %v1322 = vshrl.u32 %v1321, 7
        %v1323 = vsub.s32 %v585, %v1322
        %v1324 = vrot.slane %v1259, %v1323
        %v1325 = vlaneseq
        %v1326 = vshrl.u32 %v1325, 7
        %v1327 = vsub.s32 %v1119, %v1326
        %v1328 = vrot.slane %v1262, %v1327
        %v1329 = vsel %vm1124, %v1328, %v1324
        %v1330 = vlaneseq
        %v1331 = vshrl.u32 %v1330, 7
        %v1332 = vsub.s32 %v1126, %v1331
        %v1333 = vrot.slane %v1265, %v1332
        %v1334 = vsel %vm1131, %v1333, %v1329
        %v1335 = vlaneseq
        %v1336 = vshrl.u32 %v1335, 7
        %v1337 = vsub.s32 %v1133, %v1336
        %v1338 = vrot.slane %v1268, %v1337
        %v1339 = vsel %vm1138, %v1338, %v1334
        %v1340 = vlaneseq
        %v1341 = vshrl.u32 %v1340, 7
        %v1342 = vsub.s32 %v1140, %v1341
        %v1343 = vrot.slane %v1271, %v1342
        %v1344 = vsel %vm1145, %v1343, %v1339
        %v1345 = vlaneseq
        %v1346 = vshrl.u32 %v1345, 7
        %v1347 = vsub.s32 %v1147, %v1346
        %v1348 = vrot.slane %v1274, %v1347
        %v1349 = vsel %vm1152, %v1348, %v1344
        %v1350 = vlaneseq
        %v1351 = vshrl.u32 %v1350, 7
        %v1352 = vsub.s32 %v1154, %v1351
        %v1353 = vrot.slane %v1277, %v1352
        %v1354 = vsel %vm1159, %v1353, %v1349
        %v1355 = vlaneseq
        %v1356 = vshrl.u32 %v1355, 7
        %v1357 = vsub.s32 %v1161, %v1356
        %v1358 = vrot.slane %v1280, %v1357
        %v1359 = vsel %vm1166, %v1358, %v1354
        %v1360 = vlaneseq
        %v1361 = vshrl.u32 %v1360, 7
        %v1362 = vsub.s32 %v1168, %v1361
        %v1363 = vrot.slane %v1283, %v1362
        %v1364 = vsel %vm1173, %v1363, %v1359
        %v1365 = vlaneseq
        %v1366 = vshrl.u32 %v1365, 7
        %v1367 = vsub.s32 %v1175, %v1366
        %v1368 = vrot.slane %v1286, %v1367
        %v1369 = vsel %vm1180, %v1368, %v1364
        %v1370 = vlaneseq
        %v1371 = vshrl.u32 %v1370, 7
        %v1372 = vsub.s32 %v1182, %v1371
        %v1373 = vrot.slane %v1289, %v1372
        %v1374 = vsel %vm1187, %v1373, %v1369
        %v1375 = vlaneseq
        %v1376 = vshrl.u32 %v1375, 7
        %v1377 = vsub.s32 %v1189, %v1376
        %v1378 = vrot.slane %v1292, %v1377
        %v1379 = vsel %vm1194, %v1378, %v1374
        %v1380 = vlaneseq
        %v1381 = vshrl.u32 %v1380, 7
        %v1382 = vsub.s32 %v1196, %v1381
        %v1383 = vrot.slane %v1295, %v1382
        %v1384 = vsel %vm1201, %v1383, %v1379
        %v1385 = vlaneseq
        %v1386 = vshrl.u32 %v1385, 7
        %v1387 = vsub.s32 %v1203, %v1386
        %v1388 = vrot.slane %v1298, %v1387
        %v1389 = vsel %vm1208, %v1388, %v1384
        %v1390 = vlaneseq
        %v1391 = vshrl.u32 %v1390, 7
        %v1392 = vsub.s32 %v1210, %v1391
        %v1393 = vrot.slane %v1301, %v1392
        %v1394 = vsel %vm1215, %v1393, %v1389
        %v1395 = vlaneseq
        %v1396 = vshrl.u32 %v1395, 7
        %v1397 = vsub.s32 %v1217, %v1396
        %v1398 = vrot.slane %v1304, %v1397
        %v1399 = vsel %vm1222, %v1398, %v1394
        %1401 = vst [vmem:[%s261] sm:$0x1] %v1399
        %s1402 = smul.u32 16, %s24
        %p1403 = scmp.lt.s32.totalorder %s1402, 31
        %s1404 = scalar_select %p1403, %s1402, 31
        %s1405 = smul.addr %s1404, 8
        %s1406 = scalar_lea.vmem %s4, %s1405
        %s1407 = sand.u32 %s147, 1
        %s1408 = scalar_lea.sflag [#allocation3], %s1407
        %s1409 = sand.u32 %s147, 1
        %s1410 = scalar_lea.vmem [#allocation2], %s1409
        %s1411 = sand.u32 %s173, 1
        %s1412 = scalar_lea.sflag [#allocation5], %s1411
        %s1413 = sand.u32 %s173, 1
        %s1414 = scalar_lea.vmem [#allocation4], %s1413
        // Predicated region
        $region37: #{tpu_custom_call.1} parent=35 // pred_check
          %p1415 = pneg %p131
        $region38: #{tpu_custom_call.1} parent=35 // pred_check_branch
          %1417 = sbr.rel (%p1415) target = $region40
        $region39: #{tpu_custom_call.1} parent=35 // pred_region
          %s1418 = smul.u32 16, %s24
        $region40: #{tpu_custom_call.1} parent=35 // pred_fallthru
          _
        // Predicated region
        $region41: #{tpu_custom_call.1} parent=35 // pred_check
          %p1419 = pneg %p157
        $region42: #{tpu_custom_call.1} parent=35 // pred_check_branch
          %1421 = sbr.rel (%p1419) target = $region44
        $region43: #{tpu_custom_call.1} parent=35 // pred_region
          %s1423 = ssub.s32 16, 16
          %1424 = vsyncadd %s1408, %s1423
          %s1425 = smul.addr %s24, 16
          %s1426 = scalar_lea.hbm %s5, %s1425
          %s1428 = sshll.u32 %s1410, 4
          %s1429 = int_to_ptr.vmem [resolvable:$true] %s1428
          %1431 = dma.vmem_to_hbm [thread:$0]  %s1429, 16, %s1426, %s1408
        $region44: #{tpu_custom_call.1} parent=35 // pred_fallthru
          _
        // Predicated region
        $region45: #{tpu_custom_call.1} parent=35 // pred_check
          %p1432 = pneg %p183
        $region46: #{tpu_custom_call.1} parent=35 // pred_check_branch
          %1434 = sbr.rel (%p1432) target = $region48
        $region47: #{tpu_custom_call.1} parent=35 // pred_region
          %s1436 = ssub.s32 16, 16
          %1437 = vsyncadd %s1412, %s1436
          %s1438 = smul.addr %s24, 16
          %s1439 = scalar_lea.hbm %s6, %s1438
          %s1441 = sshll.u32 %s1414, 4
          %s1442 = int_to_ptr.vmem [resolvable:$true] %s1441
          %1444 = dma.vmem_to_hbm [thread:$0]  %s1442, 16, %s1439, %s1412
        $region48: #{tpu_custom_call.1} parent=35 // pred_fallthru
          _
      $region36: #{tpu_custom_call.1} parent=5 // pred_fallthru
        _
      %p1445 = scmp.le.s32.totalorder 2, %s19
      // Predicated region
      $region49: #{tpu_custom_call.1} parent=5 // pred_check
        %p1446 = pneg %p1445
      $region50: #{tpu_custom_call.1} parent=5 // pred_check_branch
        %1448 = sbr.rel (%p1446) target = $region52
      $region51: #{tpu_custom_call.1} parent=5 // pred_region
        %s1449 = ssub.s32 %s19, 2
        // Predicated region
        $region53: #{tpu_custom_call.1} parent=51 // pred_check
          %p1450 = pneg %p137
        $region54: #{tpu_custom_call.1} parent=51 // pred_check_branch
          %1452 = sbr.rel (%p1450) target = $region56
        $region55: #{tpu_custom_call.1} parent=51 // pred_region
          %s1453 = smul.u32 16, %s25
          %p1454 = scmp.lt.s32.totalorder %s1453, 31
          %s1455 = scalar_select %p1454, %s1453, 31
          %s1456 = smul.addr %s1455, 8
          %s1457 = scalar_lea.vmem %s4, %s1456
        $region56: #{tpu_custom_call.1} parent=51 // pred_fallthru
          _
        // Predicated region
        $region57: #{tpu_custom_call.1} parent=51 // pred_check
          %p1458 = pneg %p163
        $region58: #{tpu_custom_call.1} parent=51 // pred_check_branch
          %1460 = sbr.rel (%p1458) target = $region60
        $region59: #{tpu_custom_call.1} parent=51 // pred_region
          %s1461 = sand.u32 %s148, 1
          %s1462 = scalar_lea.sflag [#allocation3], %s1461
          %s1463 = sand.u32 %s148, 1
          %s1464 = scalar_lea.vmem [#allocation2], %s1463
          %1465 = dma.done %s1462, 16
        $region60: #{tpu_custom_call.1} parent=51 // pred_fallthru
          _
        // Predicated region
        $region61: #{tpu_custom_call.1} parent=51 // pred_check
          %p1466 = pneg %p189
        $region62: #{tpu_custom_call.1} parent=51 // pred_check_branch
          %1468 = sbr.rel (%p1466) target = $region64
        $region63: #{tpu_custom_call.1} parent=51 // pred_region
          %s1469 = sand.u32 %s174, 1
          %s1470 = scalar_lea.sflag [#allocation5], %s1469
          %s1471 = sand.u32 %s174, 1
          %s1472 = scalar_lea.vmem [#allocation4], %s1471
          %1473 = dma.done %s1470, 16
        $region64: #{tpu_custom_call.1} parent=51 // pred_fallthru
          _
      $region52: #{tpu_custom_call.1} parent=5 // pred_fallthru
        _
    $region6: #{tpu_custom_call.1} parent=1 // loop_footer
      %s23 = sadd.s32 1, %s19
    $region7: #{tpu_custom_call.1} parent=1 // loop_footer_branch
      %18 = sbr.rel target = $region3
    $region8: #{tpu_custom_call.1} parent=1 // loop_exit
      _
    %1474 = vsyncpa [#allocation3], 1
    %s1475 = scalar_lea.sflag [#allocation3], 1
    %1476 = vsyncpa %s1475, 1
    %1477 = vsyncpa [#allocation5], 1
    %s1478 = scalar_lea.sflag [#allocation5], 1
    %1479 = vsyncpa %s1478, 1

</llo_original>
